<compile_context>
chip_gen: v5e
topology: v5e:2x2
jax: 0.10.0
libtpu: 0.0.40
codegen_flags: <defaults>
</compile_context>

<pallas_src>
import math

import jax
import jax.numpy as jnp
from jax.experimental import pallas as pl

# ---- GraphTransformerBaseBlock hyperparameters (small, synthetic) ----
IN_CHANNELS = 32
HIDDEN_DIM = 64
OUT_CHANNELS = 32
NUM_HEADS = 4
HEAD_DIM = OUT_CHANNELS // NUM_HEADS  # out_channels_conv
EDGE_DIM = 16
NUM_CHUNKS = 1
LN_EPS = 1e-5

N_NODES = 16
N_EDGES = 48


def _gelu_exact(x):
    # matches torch.nn.GELU(approximate='none')
    return 0.5 * x * (1.0 + jax.lax.erf(x / jnp.sqrt(jnp.float32(2.0))))


# ------------------------- fused forward kernel -----------------------------
def _fused_block_kernel(
    x_ref,        # [N, Cin]        f32
    ea_ref,       # [E, EDGE_DIM]   f32
    src_ref,      # [E, 1]          i32
    dst_ref,      # [1, E]          i32
    ln_attn_ref,  # [2, Cin]        (gamma; beta)
    w_qkvs_ref,   # [Cin, 4*OUT]    (q | k | v | self)
    b_qkvs_ref,   # [1, 4*OUT]
    w_edge_ref,   # [EDGE_DIM, OUT]
    b_edge_ref,   # [1, OUT]
    w_proj_ref,   # [OUT, OUT]
    b_proj_ref,   # [1, OUT]
    ln_mlp_ref,   # [2, OUT]
    w1_ref,       # [OUT, HIDDEN]
    b1_ref,       # [1, HIDDEN]
    w2_ref,       # [HIDDEN, OUT]
    b2_ref,       # [1, OUT]
    o_ref,        # [N, OUT]
):
    x = x_ref[...]
    n = x.shape[0]
    e = ea_ref.shape[0]

    # ---- LayerNorm (attention) ----
    mean = jnp.mean(x, axis=-1, keepdims=True)
    var = jnp.mean(jnp.square(x - mean), axis=-1, keepdims=True)
    x_ln = (x - mean) * jax.lax.rsqrt(var + LN_EPS)
    x_ln = x_ln * ln_attn_ref[0:1, :] + ln_attn_ref[1:2, :]

    # ---- merged Q/K/V/self projection (one lane-dense [Cin, 128] matmul) ----
    qkvs = (
        jnp.dot(x_ln, w_qkvs_ref[...], preferred_element_type=jnp.float32)
        + b_qkvs_ref[...]
    )
    q = qkvs[:, 0 * OUT_CHANNELS:1 * OUT_CHANNELS]
    k = qkvs[:, 1 * OUT_CHANNELS:2 * OUT_CHANNELS]
    v = qkvs[:, 2 * OUT_CHANNELS:3 * OUT_CHANNELS]
    x_r = qkvs[:, 3 * OUT_CHANNELS:4 * OUT_CHANNELS]

    # ---- edge embedding ----
    edg = (
        jnp.dot(ea_ref[...], w_edge_ref[...], preferred_element_type=jnp.float32)
        + b_edge_ref[...]
    )  # [E, OUT]

    # ---- gather k/v to edge source nodes via one-hot matmul (no XLA gather) ----
    src = src_ref[...]                                              # [E, 1] i32
    node_iota_e = jax.lax.broadcasted_iota(jnp.int32, (e, n), 1)    # [E, N]
    src_onehot = (node_iota_e == src).astype(jnp.float32)           # [E, N]
    ke = jnp.dot(src_onehot, k, preferred_element_type=jnp.float32) + edg  # [E, OUT]
    ve = jnp.dot(src_onehot, v, preferred_element_type=jnp.float32) + edg  # [E, OUT]

    # ---- destination-node mask built on the fly ----
    dst = dst_ref[...]                                              # [1, E] i32
    dst_iota = jax.lax.broadcasted_iota(jnp.int32, (n, e), 0)       # [N, E]
    mask = (dst_iota == dst).astype(jnp.float32)                    # [N, E]

    scale = jnp.float32(1.0 / math.sqrt(HEAD_DIM))
    neg = jnp.float32(-1e30)
    ch_iota = jax.lax.broadcasted_iota(jnp.int32, (1, OUT_CHANNELS), 1)

    # ---- per-head masked softmax attention (unrolled; K=32 contractions
    #      via channel masks -> no lane slicing / concat, better MXU depth) ----
    attn = jnp.zeros((n, OUT_CHANNELS), jnp.float32)
    for h in range(NUM_HEADS):
        head_mask = (
            (ch_iota >= h * HEAD_DIM) & (ch_iota < (h + 1) * HEAD_DIM)
        ).astype(jnp.float32)                                       # [1, OUT]
        qm = q * head_mask
        # scores[i, e] = q_i(head h) . (k_{src_e} + edge_e)(head h)
        scores = jax.lax.dot_general(
            qm, ke, (((1,), (1,)), ((), ())), preferred_element_type=jnp.float32
        ) * scale                                                   # [N, E]
        s = jnp.where(mask > 0, scores, neg)
        m = jnp.max(s, axis=-1, keepdims=True)
        m = jnp.where(m <= jnp.float32(-1e29), jnp.float32(0.0), m)  # empty-row guard
        p = jnp.exp(s - m) * mask
        denom = jnp.sum(p, axis=-1, keepdims=True)
        denom = jnp.where(denom == 0.0, jnp.float32(1.0), denom)
        alpha = p * pl.reciprocal(denom, approx=True)               # softmax per dst
        # head-h channels of the aggregated message; other channels are zero
        attn = attn + jnp.dot(
            alpha, ve * head_mask, preferred_element_type=jnp.float32
        )

    # ---- projection + residuals ----
    out = (
        jnp.dot(attn + x_r, w_proj_ref[...], preferred_element_type=jnp.float32)
        + b_proj_ref[...]
    )
    out = out + x  # x_skip (in_channels == out_channels)

    # ---- LN_mlp + node_dst_mlp + residual ----
    mean2 = jnp.mean(out, axis=-1, keepdims=True)
    var2 = jnp.mean(jnp.square(out - mean2), axis=-1, keepdims=True)
    o_ln = (out - mean2) * jax.lax.rsqrt(var2 + LN_EPS)
    o_ln = o_ln * ln_mlp_ref[0:1, :] + ln_mlp_ref[1:2, :]
    hdn = (
        jnp.dot(o_ln, w1_ref[...], preferred_element_type=jnp.float32) + b1_ref[...]
    )
    hdn = _gelu_exact(hdn)
    o_ref[...] = (
        jnp.dot(hdn, w2_ref[...], preferred_element_type=jnp.float32)
        + b2_ref[...]
        + out
    )


# ------------------------------ parameters ---------------------------------
def _lin_init(key, cin, cout):
    k1, k2 = jax.random.split(key)
    bound = 1.0 / math.sqrt(cin)
    w = jax.random.uniform(k1, (cin, cout), jnp.float32, -bound, bound)
    b = jax.random.uniform(k2, (cout,), jnp.float32, -bound, bound)
    return w, b


def init_params(key):
    keys = jax.random.split(key, 8)
    return {
        "lin_query": _lin_init(keys[0], IN_CHANNELS, OUT_CHANNELS),
        "lin_key": _lin_init(keys[1], IN_CHANNELS, OUT_CHANNELS),
        "lin_value": _lin_init(keys[2], IN_CHANNELS, OUT_CHANNELS),
        "lin_self": _lin_init(keys[3], IN_CHANNELS, OUT_CHANNELS),
        "lin_edge": _lin_init(keys[4], EDGE_DIM, OUT_CHANNELS),
        "projection": _lin_init(keys[5], OUT_CHANNELS, OUT_CHANNELS),
        "mlp1": _lin_init(keys[6], OUT_CHANNELS, HIDDEN_DIM),
        "mlp2": _lin_init(keys[7], HIDDEN_DIM, OUT_CHANNELS),
        "ln_attn": (jnp.ones((IN_CHANNELS,), jnp.float32),
                    jnp.zeros((IN_CHANNELS,), jnp.float32)),
        "ln_mlp": (jnp.ones((OUT_CHANNELS,), jnp.float32),
                   jnp.zeros((OUT_CHANNELS,), jnp.float32)),
    }


def pack_params(p):
    """One-time fusion of the per-layer weights into the fused-kernel layout."""
    w_qkvs = jnp.concatenate(
        [p["lin_query"][0], p["lin_key"][0], p["lin_value"][0], p["lin_self"][0]],
        axis=1,
    )  # [Cin, 4*OUT] = [32, 128]  (lane-dense)
    b_qkvs = jnp.concatenate(
        [p["lin_query"][1], p["lin_key"][1], p["lin_value"][1], p["lin_self"][1]]
    ).reshape(1, -1)
    return {
        "ln_attn": jnp.stack(p["ln_attn"], axis=0),          # [2, Cin]
        "w_qkvs": w_qkvs,
        "b_qkvs": b_qkvs,
        "w_edge": p["lin_edge"][0],
        "b_edge": p["lin_edge"][1].reshape(1, -1),
        "w_proj": p["projection"][0],
        "b_proj": p["projection"][1].reshape(1, -1),
        "ln_mlp": jnp.stack(p["ln_mlp"], axis=0),             # [2, OUT]
        "w1": p["mlp1"][0],
        "b1": p["mlp1"][1].reshape(1, -1),
        "w2": p["mlp2"][0],
        "b2": p["mlp2"][1].reshape(1, -1),
    }


# ------------------------------- forward -----------------------------------
def graph_transformer_block_forward(packed, x, edge_attr, edge_index, batch_size=1):
    # model_comm_group=None, batch_size=1, qk_norm=False, num_chunks=1
    n = x.shape[0]
    e = edge_attr.shape[0]
    src = edge_index[0].astype(jnp.int32).reshape(e, 1)   # [E, 1]
    dst = edge_index[1].astype(jnp.int32).reshape(1, e)   # [1, E]

    nodes_new = pl.pallas_call(
        _fused_block_kernel,
        out_shape=jax.ShapeDtypeStruct((n, OUT_CHANNELS), jnp.float32),
    )(
        x, edge_attr, src, dst,
        packed["ln_attn"], packed["w_qkvs"], packed["b_qkvs"],
        packed["w_edge"], packed["b_edge"],
        packed["w_proj"], packed["b_proj"],
        packed["ln_mlp"], packed["w1"], packed["b1"],
        packed["w2"], packed["b2"],
    )
    return nodes_new, edge_attr


# ----------------------- pure-JAX reference (check) -------------------------
def reference_forward(params, x, edge_attr, edge_index):
    def lin(t, wb):
        return t @ wb[0] + wb[1]

    def ln(t, gb):
        m = t.mean(-1, keepdims=True)
        v = ((t - m) ** 2).mean(-1, keepdims=True)
        return (t - m) / jnp.sqrt(v + LN_EPS) * gb[0] + gb[1]

    n = x.shape[0]
    x_skip = x
    xl = ln(x, params["ln_attn"])
    x_r = lin(xl, params["lin_self"])
    q = lin(xl, params["lin_query"]).reshape(n, NUM_HEADS, HEAD_DIM)
    k = lin(xl, params["lin_key"]).reshape(n, NUM_HEADS, HEAD_DIM)
    v = lin(xl, params["lin_value"]).reshape(n, NUM_HEADS, HEAD_DIM)
    e = lin(edge_attr, params["lin_edge"]).reshape(-1, NUM_HEADS, HEAD_DIM)
    src, dst = edge_index[0], edge_index[1]
    kj = k[src] + e
    vj = v[src] + e
    qi = q[dst]
    score = (qi * kj).sum(-1) / math.sqrt(HEAD_DIM)  # [E, H]
    seg_max = jax.ops.segment_max(score, dst, num_segments=n)
    seg_max = jnp.where(jnp.isfinite(seg_max), seg_max, 0.0)
    p = jnp.exp(score - seg_max[dst])
    seg_sum = jax.ops.segment_sum(p, dst, num_segments=n)
    alpha = p / seg_sum[dst]
    msg = vj * alpha[..., None]
    out = jax.ops.segment_sum(msg, dst, num_segments=n).reshape(n, OUT_CHANNELS)
    out = lin(out + x_r, params["projection"])
    out = out + x_skip
    h = _gelu_exact(lin(ln(out, params["ln_mlp"]), params["mlp1"]))
    nodes_new = lin(h, params["mlp2"]) + out
    return nodes_new


# --------------------------------- main -------------------------------------
if __name__ == "__main__":
    root = jax.random.PRNGKey(0)
    kp, kx, ke, ks, kd = jax.random.split(root, 5)

    params = init_params(kp)
    packed = pack_params(params)

    x = jax.random.normal(kx, (N_NODES, IN_CHANNELS), jnp.float32)
    edge_attr = jax.random.normal(ke, (N_EDGES, EDGE_DIM), jnp.float32)
    src = jax.random.randint(ks, (N_EDGES,), 0, N_NODES, dtype=jnp.int32)
    dst = jax.random.randint(kd, (N_EDGES,), 0, N_NODES, dtype=jnp.int32)
    edge_index = jnp.stack([src, dst], axis=0)  # [2, E]

    nodes_new, edge_out = graph_transformer_block_forward(
        packed, x, edge_attr, edge_index, batch_size=1
    )
    jax.block_until_ready(nodes_new)

    ref = reference_forward(params, x, edge_attr, edge_index)
    assert nodes_new.shape == (N_NODES, OUT_CHANNELS)
    assert edge_out.shape == (N_EDGES, EDGE_DIM)
    assert jnp.allclose(nodes_new, ref, atol=3e-3, rtol=3e-3)

    print("KERNEL_OK")
</pallas_src>

<mosaic_0001>
module attributes {stable_mosaic.version = 11 : i64} {
  func.func @_fused_block_kernel(%arg0: memref<16x32xf32, #tpu.memory_space<vmem>>, %arg1: memref<48x16xf32, #tpu.memory_space<vmem>>, %arg2: memref<48x1xi32, #tpu.memory_space<vmem>>, %arg3: memref<1x48xi32, #tpu.memory_space<vmem>>, %arg4: memref<2x32xf32, #tpu.memory_space<vmem>>, %arg5: memref<32x128xf32, #tpu.memory_space<vmem>>, %arg6: memref<1x128xf32, #tpu.memory_space<vmem>>, %arg7: memref<16x32xf32, #tpu.memory_space<vmem>>, %arg8: memref<1x32xf32, #tpu.memory_space<vmem>>, %arg9: memref<32x32xf32, #tpu.memory_space<vmem>>, %arg10: memref<1x32xf32, #tpu.memory_space<vmem>>, %arg11: memref<2x32xf32, #tpu.memory_space<vmem>>, %arg12: memref<32x64xf32, #tpu.memory_space<vmem>>, %arg13: memref<1x64xf32, #tpu.memory_space<vmem>>, %arg14: memref<64x32xf32, #tpu.memory_space<vmem>>, %arg15: memref<1x32xf32, #tpu.memory_space<vmem>>, %arg16: memref<16x32xf32, #tpu.memory_space<vmem>>) attributes {dimension_semantics = [], scalar_prefetch = 0 : i64, scratch_operands = 0 : i64, tpu.core_type = #tpu.core_type<tc>} {
    %c0 = arith.constant 0 : index
    %c0_0 = arith.constant 0 : index
    %0 = vector.load %arg0[%c0, %c0_0] : memref<16x32xf32, #tpu.memory_space<vmem>>, vector<16x32xf32>
    %cst = arith.constant dense<0.000000e+00> : vector<16xf32>
    %1 = vector.multi_reduction <add>, %0, %cst [1] : vector<16x32xf32> to vector<16xf32>
    %2 = vector.shape_cast %1 : vector<16xf32> to vector<16x1xf32>
    %cst_1 = arith.constant 3.200000e+01 : f32
    %3 = vector.broadcast %cst_1 : f32 to vector<16x1xf32>
    %4 = arith.divf %2, %3 : vector<16x1xf32>
    %5 = vector.broadcast %4 : vector<16x1xf32> to vector<16x32xf32>
    %6 = arith.subf %0, %5 : vector<16x32xf32>
    %7 = arith.mulf %6, %6 : vector<16x32xf32>
    %cst_2 = arith.constant dense<0.000000e+00> : vector<16xf32>
    %8 = vector.multi_reduction <add>, %7, %cst_2 [1] : vector<16x32xf32> to vector<16xf32>
    %9 = vector.shape_cast %8 : vector<16xf32> to vector<16x1xf32>
    %cst_3 = arith.constant 3.200000e+01 : f32
    %10 = vector.broadcast %cst_3 : f32 to vector<16x1xf32>
    %11 = arith.divf %9, %10 : vector<16x1xf32>
    %12 = vector.broadcast %4 : vector<16x1xf32> to vector<16x32xf32>
    %13 = arith.subf %0, %12 : vector<16x32xf32>
    %cst_4 = arith.constant 9.99999974E-6 : f32
    %14 = vector.broadcast %cst_4 : f32 to vector<16x1xf32>
    %15 = arith.addf %11, %14 : vector<16x1xf32>
    %16 = math.rsqrt %15 : vector<16x1xf32>
    %17 = vector.broadcast %16 : vector<16x1xf32> to vector<16x32xf32>
    %18 = arith.mulf %13, %17 : vector<16x32xf32>
    %c0_5 = arith.constant 0 : index
    %c0_6 = arith.constant 0 : index
    %19 = vector.load %arg4[%c0_5, %c0_6] : memref<2x32xf32, #tpu.memory_space<vmem>>, vector<1x32xf32>
    %20 = vector.broadcast %19 : vector<1x32xf32> to vector<16x32xf32>
    %21 = arith.mulf %18, %20 : vector<16x32xf32>
    %c1 = arith.constant 1 : index
    %c0_7 = arith.constant 0 : index
    %22 = vector.load %arg4[%c1, %c0_7] : memref<2x32xf32, #tpu.memory_space<vmem>>, vector<1x32xf32>
    %23 = vector.broadcast %22 : vector<1x32xf32> to vector<16x32xf32>
    %24 = arith.addf %21, %23 : vector<16x32xf32>
    %c0_8 = arith.constant 0 : index
    %c0_9 = arith.constant 0 : index
    %25 = vector.load %arg5[%c0_8, %c0_9] : memref<32x128xf32, #tpu.memory_space<vmem>>, vector<32x128xf32>
    %cst_10 = arith.constant dense<0.000000e+00> : vector<16x128xf32>
    %26 = tpu.matmul %24, %25, %cst_10 {dimension_numbers = #tpu.dot_dimension_numbers<[1], [0], [0], [1], [0, 0, 1, 1], [], []>} : vector<16x32xf32>, vector<32x128xf32>, vector<16x128xf32> -> vector<16x128xf32>
    %c0_11 = arith.constant 0 : index
    %c0_12 = arith.constant 0 : index
    %27 = vector.load %arg6[%c0_11, %c0_12] : memref<1x128xf32, #tpu.memory_space<vmem>>, vector<1x128xf32>
    %28 = vector.broadcast %27 : vector<1x128xf32> to vector<16x128xf32>
    %29 = arith.addf %26, %28 : vector<16x128xf32>
    %30 = vector.extract_strided_slice %29 {offsets = [0, 0], sizes = [16, 32], strides = [1, 1]} : vector<16x128xf32> to vector<16x32xf32>
    %31 = vector.extract_strided_slice %29 {offsets = [0, 32], sizes = [16, 32], strides = [1, 1]} : vector<16x128xf32> to vector<16x32xf32>
    %32 = vector.extract_strided_slice %29 {offsets = [0, 64], sizes = [16, 32], strides = [1, 1]} : vector<16x128xf32> to vector<16x32xf32>
    %33 = vector.extract_strided_slice %29 {offsets = [0, 96], sizes = [16, 32], strides = [1, 1]} : vector<16x128xf32> to vector<16x32xf32>
    %c0_13 = arith.constant 0 : index
    %c0_14 = arith.constant 0 : index
    %34 = vector.load %arg1[%c0_13, %c0_14] : memref<48x16xf32, #tpu.memory_space<vmem>>, vector<48x16xf32>
    %c0_15 = arith.constant 0 : index
    %c0_16 = arith.constant 0 : index
    %35 = vector.load %arg7[%c0_15, %c0_16] : memref<16x32xf32, #tpu.memory_space<vmem>>, vector<16x32xf32>
    %cst_17 = arith.constant dense<0.000000e+00> : vector<48x32xf32>
    %36 = tpu.matmul %34, %35, %cst_17 {dimension_numbers = #tpu.dot_dimension_numbers<[1], [0], [0], [1], [0, 0, 1, 1], [], []>} : vector<48x16xf32>, vector<16x32xf32>, vector<48x32xf32> -> vector<48x32xf32>
    %c0_18 = arith.constant 0 : index
    %c0_19 = arith.constant 0 : index
    %37 = vector.load %arg8[%c0_18, %c0_19] : memref<1x32xf32, #tpu.memory_space<vmem>>, vector<1x32xf32>
    %38 = vector.broadcast %37 : vector<1x32xf32> to vector<48x32xf32>
    %39 = arith.addf %36, %38 : vector<48x32xf32>
    %c0_20 = arith.constant 0 : index
    %c0_21 = arith.constant 0 : index
    %40 = vector.load %arg2[%c0_20, %c0_21] : memref<48x1xi32, #tpu.memory_space<vmem>>, vector<48x1xi32>
    %41 = tpu.iota {dimensions = array<i32: 1>} : vector<48x16xi32>
    %42 = vector.broadcast %40 : vector<48x1xi32> to vector<48x16xi32>
    %43 = arith.cmpi eq, %41, %42 : vector<48x16xi32>
    %44 = arith.extui %43 : vector<48x16xi1> to vector<48x16xi32>
    %45 = arith.sitofp %44 : vector<48x16xi32> to vector<48x16xf32>
    %cst_22 = arith.constant dense<0.000000e+00> : vector<48x32xf32>
    %46 = tpu.matmul %45, %31, %cst_22 {dimension_numbers = #tpu.dot_dimension_numbers<[1], [0], [0], [1], [0, 0, 1, 1], [], []>} : vector<48x16xf32>, vector<16x32xf32>, vector<48x32xf32> -> vector<48x32xf32>
    %47 = arith.addf %46, %39 : vector<48x32xf32>
    %cst_23 = arith.constant dense<0.000000e+00> : vector<48x32xf32>
    %48 = tpu.matmul %45, %32, %cst_23 {dimension_numbers = #tpu.dot_dimension_numbers<[1], [0], [0], [1], [0, 0, 1, 1], [], []>} : vector<48x16xf32>, vector<16x32xf32>, vector<48x32xf32> -> vector<48x32xf32>
    %49 = arith.addf %48, %39 : vector<48x32xf32>
    %c0_24 = arith.constant 0 : index
    %c0_25 = arith.constant 0 : index
    %50 = vector.load %arg3[%c0_24, %c0_25] : memref<1x48xi32, #tpu.memory_space<vmem>>, vector<1x48xi32>
    %51 = tpu.iota {dimensions = array<i32: 0>} : vector<16x48xi32>
    %52 = vector.broadcast %50 : vector<1x48xi32> to vector<16x48xi32>
    %53 = arith.cmpi eq, %51, %52 : vector<16x48xi32>
    %54 = arith.extui %53 : vector<16x48xi1> to vector<16x48xi32>
    %55 = arith.sitofp %54 : vector<16x48xi32> to vector<16x48xf32>
    %56 = tpu.iota {dimensions = array<i32: 1>} : vector<1x32xi32>
    %cst_26 = arith.constant 0.000000e+00 : f32
    %57 = vector.broadcast %cst_26 : f32 to vector<16x32xf32>
    %c0_i32 = arith.constant 0 : i32
    %58 = vector.broadcast %c0_i32 : i32 to vector<1x32xi32>
    %59 = arith.cmpi sge, %56, %58 : vector<1x32xi32>
    %c8_i32 = arith.constant 8 : i32
    %60 = vector.broadcast %c8_i32 : i32 to vector<1x32xi32>
    %61 = arith.cmpi slt, %56, %60 : vector<1x32xi32>
    %62 = arith.andi %59, %61 : vector<1x32xi1>
    %63 = arith.extui %62 : vector<1x32xi1> to vector<1x32xi32>
    %64 = arith.sitofp %63 : vector<1x32xi32> to vector<1x32xf32>
    %65 = vector.broadcast %64 : vector<1x32xf32> to vector<16x32xf32>
    %66 = arith.mulf %30, %65 : vector<16x32xf32>
    %cst_27 = arith.constant dense<0.000000e+00> : vector<16x48xf32>
    %67 = tpu.matmul %66, %47, %cst_27 {dimension_numbers = #tpu.dot_dimension_numbers<[1], [1], [0], [0], [0, 0, 1, 0], [], []>} : vector<16x32xf32>, vector<48x32xf32>, vector<16x48xf32> -> vector<16x48xf32>
    %cst_28 = arith.constant 0.353553385 : f32
    %68 = vector.broadcast %cst_28 : f32 to vector<16x48xf32>
    %69 = arith.mulf %67, %68 : vector<16x48xf32>
    %cst_29 = arith.constant 0.000000e+00 : f32
    %70 = vector.broadcast %cst_29 : f32 to vector<16x48xf32>
    %71 = arith.cmpf ogt, %55, %70 : vector<16x48xf32>
    %cst_30 = arith.constant -1.000000e+30 : f32
    %72 = vector.broadcast %cst_30 : f32 to vector<16x48xf32>
    %73 = arith.select %71, %69, %72 : vector<16x48xi1>, vector<16x48xf32>
    %cst_31 = arith.constant dense<0xFF800000> : vector<16xf32>
    %74 = vector.multi_reduction <maximumf>, %73, %cst_31 [1] : vector<16x48xf32> to vector<16xf32>
    %75 = vector.shape_cast %74 : vector<16xf32> to vector<16x1xf32>
    %cst_32 = arith.constant -1.000000e+29 : f32
    %76 = vector.broadcast %cst_32 : f32 to vector<16x1xf32>
    %77 = arith.cmpf ole, %75, %76 : vector<16x1xf32>
    %cst_33 = arith.constant 0.000000e+00 : f32
    %78 = vector.broadcast %cst_33 : f32 to vector<16x1xf32>
    %79 = arith.select %77, %78, %75 : vector<16x1xi1>, vector<16x1xf32>
    %80 = vector.broadcast %79 : vector<16x1xf32> to vector<16x48xf32>
    %81 = arith.subf %73, %80 : vector<16x48xf32>
    %82 = math.exp %81 : vector<16x48xf32>
    %83 = arith.mulf %82, %55 : vector<16x48xf32>
    %cst_34 = arith.constant dense<0.000000e+00> : vector<16xf32>
    %84 = vector.multi_reduction <add>, %83, %cst_34 [1] : vector<16x48xf32> to vector<16xf32>
    %85 = vector.shape_cast %84 : vector<16xf32> to vector<16x1xf32>
    %cst_35 = arith.constant 0.000000e+00 : f32
    %86 = vector.broadcast %cst_35 : f32 to vector<16x1xf32>
    %87 = arith.cmpf oeq, %85, %86 : vector<16x1xf32>
    %cst_36 = arith.constant 1.000000e+00 : f32
    %88 = vector.broadcast %cst_36 : f32 to vector<16x1xf32>
    %89 = arith.select %87, %88, %85 : vector<16x1xi1>, vector<16x1xf32>
    %90 = tpu.reciprocal %89 {approx = true} : vector<16x1xf32> -> vector<16x1xf32>
    %91 = vector.broadcast %90 : vector<16x1xf32> to vector<16x48xf32>
    %92 = arith.mulf %83, %91 : vector<16x48xf32>
    %93 = vector.broadcast %64 : vector<1x32xf32> to vector<48x32xf32>
    %94 = arith.mulf %49, %93 : vector<48x32xf32>
    %cst_37 = arith.constant dense<0.000000e+00> : vector<16x32xf32>
    %95 = tpu.matmul %92, %94, %cst_37 {dimension_numbers = #tpu.dot_dimension_numbers<[1], [0], [0], [1], [0, 0, 1, 1], [], []>} : vector<16x48xf32>, vector<48x32xf32>, vector<16x32xf32> -> vector<16x32xf32>
    %96 = arith.addf %57, %95 : vector<16x32xf32>
    %c8_i32_38 = arith.constant 8 : i32
    %97 = vector.broadcast %c8_i32_38 : i32 to vector<1x32xi32>
    %98 = arith.cmpi sge, %56, %97 : vector<1x32xi32>
    %c16_i32 = arith.constant 16 : i32
    %99 = vector.broadcast %c16_i32 : i32 to vector<1x32xi32>
    %100 = arith.cmpi slt, %56, %99 : vector<1x32xi32>
    %101 = arith.andi %98, %100 : vector<1x32xi1>
    %102 = arith.extui %101 : vector<1x32xi1> to vector<1x32xi32>
    %103 = arith.sitofp %102 : vector<1x32xi32> to vector<1x32xf32>
    %104 = vector.broadcast %103 : vector<1x32xf32> to vector<16x32xf32>
    %105 = arith.mulf %30, %104 : vector<16x32xf32>
    %cst_39 = arith.constant dense<0.000000e+00> : vector<16x48xf32>
    %106 = tpu.matmul %105, %47, %cst_39 {dimension_numbers = #tpu.dot_dimension_numbers<[1], [1], [0], [0], [0, 0, 1, 0], [], []>} : vector<16x32xf32>, vector<48x32xf32>, vector<16x48xf32> -> vector<16x48xf32>
    %cst_40 = arith.constant 0.353553385 : f32
    %107 = vector.broadcast %cst_40 : f32 to vector<16x48xf32>
    %108 = arith.mulf %106, %107 : vector<16x48xf32>
    %cst_41 = arith.constant 0.000000e+00 : f32
    %109 = vector.broadcast %cst_41 : f32 to vector<16x48xf32>
    %110 = arith.cmpf ogt, %55, %109 : vector<16x48xf32>
    %cst_42 = arith.constant -1.000000e+30 : f32
    %111 = vector.broadcast %cst_42 : f32 to vector<16x48xf32>
    %112 = arith.select %110, %108, %111 : vector<16x48xi1>, vector<16x48xf32>
    %cst_43 = arith.constant dense<0xFF800000> : vector<16xf32>
    %113 = vector.multi_reduction <maximumf>, %112, %cst_43 [1] : vector<16x48xf32> to vector<16xf32>
    %114 = vector.shape_cast %113 : vector<16xf32> to vector<16x1xf32>
    %cst_44 = arith.constant -1.000000e+29 : f32
    %115 = vector.broadcast %cst_44 : f32 to vector<16x1xf32>
    %116 = arith.cmpf ole, %114, %115 : vector<16x1xf32>
    %cst_45 = arith.constant 0.000000e+00 : f32
    %117 = vector.broadcast %cst_45 : f32 to vector<16x1xf32>
    %118 = arith.select %116, %117, %114 : vector<16x1xi1>, vector<16x1xf32>
    %119 = vector.broadcast %118 : vector<16x1xf32> to vector<16x48xf32>
    %120 = arith.subf %112, %119 : vector<16x48xf32>
    %121 = math.exp %120 : vector<16x48xf32>
    %122 = arith.mulf %121, %55 : vector<16x48xf32>
    %cst_46 = arith.constant dense<0.000000e+00> : vector<16xf32>
    %123 = vector.multi_reduction <add>, %122, %cst_46 [1] : vector<16x48xf32> to vector<16xf32>
    %124 = vector.shape_cast %123 : vector<16xf32> to vector<16x1xf32>
    %cst_47 = arith.constant 0.000000e+00 : f32
    %125 = vector.broadcast %cst_47 : f32 to vector<16x1xf32>
    %126 = arith.cmpf oeq, %124, %125 : vector<16x1xf32>
    %cst_48 = arith.constant 1.000000e+00 : f32
    %127 = vector.broadcast %cst_48 : f32 to vector<16x1xf32>
    %128 = arith.select %126, %127, %124 : vector<16x1xi1>, vector<16x1xf32>
    %129 = tpu.reciprocal %128 {approx = true} : vector<16x1xf32> -> vector<16x1xf32>
    %130 = vector.broadcast %129 : vector<16x1xf32> to vector<16x48xf32>
    %131 = arith.mulf %122, %130 : vector<16x48xf32>
    %132 = vector.broadcast %103 : vector<1x32xf32> to vector<48x32xf32>
    %133 = arith.mulf %49, %132 : vector<48x32xf32>
    %cst_49 = arith.constant dense<0.000000e+00> : vector<16x32xf32>
    %134 = tpu.matmul %131, %133, %cst_49 {dimension_numbers = #tpu.dot_dimension_numbers<[1], [0], [0], [1], [0, 0, 1, 1], [], []>} : vector<16x48xf32>, vector<48x32xf32>, vector<16x32xf32> -> vector<16x32xf32>
    %135 = arith.addf %96, %134 : vector<16x32xf32>
    %c16_i32_50 = arith.constant 16 : i32
    %136 = vector.broadcast %c16_i32_50 : i32 to vector<1x32xi32>
    %137 = arith.cmpi sge, %56, %136 : vector<1x32xi32>
    %c24_i32 = arith.constant 24 : i32
    %138 = vector.broadcast %c24_i32 : i32 to vector<1x32xi32>
    %139 = arith.cmpi slt, %56, %138 : vector<1x32xi32>
    %140 = arith.andi %137, %139 : vector<1x32xi1>
    %141 = arith.extui %140 : vector<1x32xi1> to vector<1x32xi32>
    %142 = arith.sitofp %141 : vector<1x32xi32> to vector<1x32xf32>
    %143 = vector.broadcast %142 : vector<1x32xf32> to vector<16x32xf32>
    %144 = arith.mulf %30, %143 : vector<16x32xf32>
    %cst_51 = arith.constant dense<0.000000e+00> : vector<16x48xf32>
    %145 = tpu.matmul %144, %47, %cst_51 {dimension_numbers = #tpu.dot_dimension_numbers<[1], [1], [0], [0], [0, 0, 1, 0], [], []>} : vector<16x32xf32>, vector<48x32xf32>, vector<16x48xf32> -> vector<16x48xf32>
    %cst_52 = arith.constant 0.353553385 : f32
    %146 = vector.broadcast %cst_52 : f32 to vector<16x48xf32>
    %147 = arith.mulf %145, %146 : vector<16x48xf32>
    %cst_53 = arith.constant 0.000000e+00 : f32
    %148 = vector.broadcast %cst_53 : f32 to vector<16x48xf32>
    %149 = arith.cmpf ogt, %55, %148 : vector<16x48xf32>
    %cst_54 = arith.constant -1.000000e+30 : f32
    %150 = vector.broadcast %cst_54 : f32 to vector<16x48xf32>
    %151 = arith.select %149, %147, %150 : vector<16x48xi1>, vector<16x48xf32>
    %cst_55 = arith.constant dense<0xFF800000> : vector<16xf32>
    %152 = vector.multi_reduction <maximumf>, %151, %cst_55 [1] : vector<16x48xf32> to vector<16xf32>
    %153 = vector.shape_cast %152 : vector<16xf32> to vector<16x1xf32>
    %cst_56 = arith.constant -1.000000e+29 : f32
    %154 = vector.broadcast %cst_56 : f32 to vector<16x1xf32>
    %155 = arith.cmpf ole, %153, %154 : vector<16x1xf32>
    %cst_57 = arith.constant 0.000000e+00 : f32
    %156 = vector.broadcast %cst_57 : f32 to vector<16x1xf32>
    %157 = arith.select %155, %156, %153 : vector<16x1xi1>, vector<16x1xf32>
    %158 = vector.broadcast %157 : vector<16x1xf32> to vector<16x48xf32>
    %159 = arith.subf %151, %158 : vector<16x48xf32>
    %160 = math.exp %159 : vector<16x48xf32>
    %161 = arith.mulf %160, %55 : vector<16x48xf32>
    %cst_58 = arith.constant dense<0.000000e+00> : vector<16xf32>
    %162 = vector.multi_reduction <add>, %161, %cst_58 [1] : vector<16x48xf32> to vector<16xf32>
    %163 = vector.shape_cast %162 : vector<16xf32> to vector<16x1xf32>
    %cst_59 = arith.constant 0.000000e+00 : f32
    %164 = vector.broadcast %cst_59 : f32 to vector<16x1xf32>
    %165 = arith.cmpf oeq, %163, %164 : vector<16x1xf32>
    %cst_60 = arith.constant 1.000000e+00 : f32
    %166 = vector.broadcast %cst_60 : f32 to vector<16x1xf32>
    %167 = arith.select %165, %166, %163 : vector<16x1xi1>, vector<16x1xf32>
    %168 = tpu.reciprocal %167 {approx = true} : vector<16x1xf32> -> vector<16x1xf32>
    %169 = vector.broadcast %168 : vector<16x1xf32> to vector<16x48xf32>
    %170 = arith.mulf %161, %169 : vector<16x48xf32>
    %171 = vector.broadcast %142 : vector<1x32xf32> to vector<48x32xf32>
    %172 = arith.mulf %49, %171 : vector<48x32xf32>
    %cst_61 = arith.constant dense<0.000000e+00> : vector<16x32xf32>
    %173 = tpu.matmul %170, %172, %cst_61 {dimension_numbers = #tpu.dot_dimension_numbers<[1], [0], [0], [1], [0, 0, 1, 1], [], []>} : vector<16x48xf32>, vector<48x32xf32>, vector<16x32xf32> -> vector<16x32xf32>
    %174 = arith.addf %135, %173 : vector<16x32xf32>
    %c24_i32_62 = arith.constant 24 : i32
    %175 = vector.broadcast %c24_i32_62 : i32 to vector<1x32xi32>
    %176 = arith.cmpi sge, %56, %175 : vector<1x32xi32>
    %c32_i32 = arith.constant 32 : i32
    %177 = vector.broadcast %c32_i32 : i32 to vector<1x32xi32>
    %178 = arith.cmpi slt, %56, %177 : vector<1x32xi32>
    %179 = arith.andi %176, %178 : vector<1x32xi1>
    %180 = arith.extui %179 : vector<1x32xi1> to vector<1x32xi32>
    %181 = arith.sitofp %180 : vector<1x32xi32> to vector<1x32xf32>
    %182 = vector.broadcast %181 : vector<1x32xf32> to vector<16x32xf32>
    %183 = arith.mulf %30, %182 : vector<16x32xf32>
    %cst_63 = arith.constant dense<0.000000e+00> : vector<16x48xf32>
    %184 = tpu.matmul %183, %47, %cst_63 {dimension_numbers = #tpu.dot_dimension_numbers<[1], [1], [0], [0], [0, 0, 1, 0], [], []>} : vector<16x32xf32>, vector<48x32xf32>, vector<16x48xf32> -> vector<16x48xf32>
    %cst_64 = arith.constant 0.353553385 : f32
    %185 = vector.broadcast %cst_64 : f32 to vector<16x48xf32>
    %186 = arith.mulf %184, %185 : vector<16x48xf32>
    %cst_65 = arith.constant 0.000000e+00 : f32
    %187 = vector.broadcast %cst_65 : f32 to vector<16x48xf32>
    %188 = arith.cmpf ogt, %55, %187 : vector<16x48xf32>
    %cst_66 = arith.constant -1.000000e+30 : f32
    %189 = vector.broadcast %cst_66 : f32 to vector<16x48xf32>
    %190 = arith.select %188, %186, %189 : vector<16x48xi1>, vector<16x48xf32>
    %cst_67 = arith.constant dense<0xFF800000> : vector<16xf32>
    %191 = vector.multi_reduction <maximumf>, %190, %cst_67 [1] : vector<16x48xf32> to vector<16xf32>
    %192 = vector.shape_cast %191 : vector<16xf32> to vector<16x1xf32>
    %cst_68 = arith.constant -1.000000e+29 : f32
    %193 = vector.broadcast %cst_68 : f32 to vector<16x1xf32>
    %194 = arith.cmpf ole, %192, %193 : vector<16x1xf32>
    %cst_69 = arith.constant 0.000000e+00 : f32
    %195 = vector.broadcast %cst_69 : f32 to vector<16x1xf32>
    %196 = arith.select %194, %195, %192 : vector<16x1xi1>, vector<16x1xf32>
    %197 = vector.broadcast %196 : vector<16x1xf32> to vector<16x48xf32>
    %198 = arith.subf %190, %197 : vector<16x48xf32>
    %199 = math.exp %198 : vector<16x48xf32>
    %200 = arith.mulf %199, %55 : vector<16x48xf32>
    %cst_70 = arith.constant dense<0.000000e+00> : vector<16xf32>
    %201 = vector.multi_reduction <add>, %200, %cst_70 [1] : vector<16x48xf32> to vector<16xf32>
    %202 = vector.shape_cast %201 : vector<16xf32> to vector<16x1xf32>
    %cst_71 = arith.constant 0.000000e+00 : f32
    %203 = vector.broadcast %cst_71 : f32 to vector<16x1xf32>
    %204 = arith.cmpf oeq, %202, %203 : vector<16x1xf32>
    %cst_72 = arith.constant 1.000000e+00 : f32
    %205 = vector.broadcast %cst_72 : f32 to vector<16x1xf32>
    %206 = arith.select %204, %205, %202 : vector<16x1xi1>, vector<16x1xf32>
    %207 = tpu.reciprocal %206 {approx = true} : vector<16x1xf32> -> vector<16x1xf32>
    %208 = vector.broadcast %207 : vector<16x1xf32> to vector<16x48xf32>
    %209 = arith.mulf %200, %208 : vector<16x48xf32>
    %210 = vector.broadcast %181 : vector<1x32xf32> to vector<48x32xf32>
    %211 = arith.mulf %49, %210 : vector<48x32xf32>
    %cst_73 = arith.constant dense<0.000000e+00> : vector<16x32xf32>
    %212 = tpu.matmul %209, %211, %cst_73 {dimension_numbers = #tpu.dot_dimension_numbers<[1], [0], [0], [1], [0, 0, 1, 1], [], []>} : vector<16x48xf32>, vector<48x32xf32>, vector<16x32xf32> -> vector<16x32xf32>
    %213 = arith.addf %174, %212 : vector<16x32xf32>
    %214 = arith.addf %213, %33 : vector<16x32xf32>
    %c0_74 = arith.constant 0 : index
    %c0_75 = arith.constant 0 : index
    %215 = vector.load %arg9[%c0_74, %c0_75] : memref<32x32xf32, #tpu.memory_space<vmem>>, vector<32x32xf32>
    %cst_76 = arith.constant dense<0.000000e+00> : vector<16x32xf32>
    %216 = tpu.matmul %214, %215, %cst_76 {dimension_numbers = #tpu.dot_dimension_numbers<[1], [0], [0], [1], [0, 0, 1, 1], [], []>} : vector<16x32xf32>, vector<32x32xf32>, vector<16x32xf32> -> vector<16x32xf32>
    %c0_77 = arith.constant 0 : index
    %c0_78 = arith.constant 0 : index
    %217 = vector.load %arg10[%c0_77, %c0_78] : memref<1x32xf32, #tpu.memory_space<vmem>>, vector<1x32xf32>
    %218 = vector.broadcast %217 : vector<1x32xf32> to vector<16x32xf32>
    %219 = arith.addf %216, %218 : vector<16x32xf32>
    %220 = arith.addf %219, %0 : vector<16x32xf32>
    %cst_79 = arith.constant dense<0.000000e+00> : vector<16xf32>
    %221 = vector.multi_reduction <add>, %220, %cst_79 [1] : vector<16x32xf32> to vector<16xf32>
    %222 = vector.shape_cast %221 : vector<16xf32> to vector<16x1xf32>
    %cst_80 = arith.constant 3.200000e+01 : f32
    %223 = vector.broadcast %cst_80 : f32 to vector<16x1xf32>
    %224 = arith.divf %222, %223 : vector<16x1xf32>
    %225 = vector.broadcast %224 : vector<16x1xf32> to vector<16x32xf32>
    %226 = arith.subf %220, %225 : vector<16x32xf32>
    %227 = arith.mulf %226, %226 : vector<16x32xf32>
    %cst_81 = arith.constant dense<0.000000e+00> : vector<16xf32>
    %228 = vector.multi_reduction <add>, %227, %cst_81 [1] : vector<16x32xf32> to vector<16xf32>
    %229 = vector.shape_cast %228 : vector<16xf32> to vector<16x1xf32>
    %cst_82 = arith.constant 3.200000e+01 : f32
    %230 = vector.broadcast %cst_82 : f32 to vector<16x1xf32>
    %231 = arith.divf %229, %230 : vector<16x1xf32>
    %232 = vector.broadcast %224 : vector<16x1xf32> to vector<16x32xf32>
    %233 = arith.subf %220, %232 : vector<16x32xf32>
    %cst_83 = arith.constant 9.99999974E-6 : f32
    %234 = vector.broadcast %cst_83 : f32 to vector<16x1xf32>
    %235 = arith.addf %231, %234 : vector<16x1xf32>
    %236 = math.rsqrt %235 : vector<16x1xf32>
    %237 = vector.broadcast %236 : vector<16x1xf32> to vector<16x32xf32>
    %238 = arith.mulf %233, %237 : vector<16x32xf32>
    %c0_84 = arith.constant 0 : index
    %c0_85 = arith.constant 0 : index
    %239 = vector.load %arg11[%c0_84, %c0_85] : memref<2x32xf32, #tpu.memory_space<vmem>>, vector<1x32xf32>
    %240 = vector.broadcast %239 : vector<1x32xf32> to vector<16x32xf32>
    %241 = arith.mulf %238, %240 : vector<16x32xf32>
    %c1_86 = arith.constant 1 : index
    %c0_87 = arith.constant 0 : index
    %242 = vector.load %arg11[%c1_86, %c0_87] : memref<2x32xf32, #tpu.memory_space<vmem>>, vector<1x32xf32>
    %243 = vector.broadcast %242 : vector<1x32xf32> to vector<16x32xf32>
    %244 = arith.addf %241, %243 : vector<16x32xf32>
    %c0_88 = arith.constant 0 : index
    %c0_89 = arith.constant 0 : index
    %245 = vector.load %arg12[%c0_88, %c0_89] : memref<32x64xf32, #tpu.memory_space<vmem>>, vector<32x64xf32>
    %cst_90 = arith.constant dense<0.000000e+00> : vector<16x64xf32>
    %246 = tpu.matmul %244, %245, %cst_90 {dimension_numbers = #tpu.dot_dimension_numbers<[1], [0], [0], [1], [0, 0, 1, 1], [], []>} : vector<16x32xf32>, vector<32x64xf32>, vector<16x64xf32> -> vector<16x64xf32>
    %c0_91 = arith.constant 0 : index
    %c0_92 = arith.constant 0 : index
    %247 = vector.load %arg13[%c0_91, %c0_92] : memref<1x64xf32, #tpu.memory_space<vmem>>, vector<1x64xf32>
    %248 = vector.broadcast %247 : vector<1x64xf32> to vector<16x64xf32>
    %249 = arith.addf %246, %248 : vector<16x64xf32>
    %cst_93 = arith.constant 5.000000e-01 : f32
    %250 = vector.broadcast %cst_93 : f32 to vector<16x64xf32>
    %251 = arith.mulf %250, %249 : vector<16x64xf32>
    %cst_94 = arith.constant 2.000000e+00 : f32
    %252 = math.sqrt %cst_94 : f32
    %253 = vector.broadcast %252 : f32 to vector<16x64xf32>
    %254 = arith.divf %249, %253 : vector<16x64xf32>
    %255 = math.erf %254 : vector<16x64xf32>
    %cst_95 = arith.constant 1.000000e+00 : f32
    %256 = vector.broadcast %cst_95 : f32 to vector<16x64xf32>
    %257 = arith.addf %256, %255 : vector<16x64xf32>
    %258 = arith.mulf %251, %257 : vector<16x64xf32>
    %c0_96 = arith.constant 0 : index
    %c0_97 = arith.constant 0 : index
    %259 = vector.load %arg14[%c0_96, %c0_97] : memref<64x32xf32, #tpu.memory_space<vmem>>, vector<64x32xf32>
    %cst_98 = arith.constant dense<0.000000e+00> : vector<16x32xf32>
    %260 = tpu.matmul %258, %259, %cst_98 {dimension_numbers = #tpu.dot_dimension_numbers<[1], [0], [0], [1], [0, 0, 1, 1], [], []>} : vector<16x64xf32>, vector<64x32xf32>, vector<16x32xf32> -> vector<16x32xf32>
    %c0_99 = arith.constant 0 : index
    %c0_100 = arith.constant 0 : index
    %261 = vector.load %arg15[%c0_99, %c0_100] : memref<1x32xf32, #tpu.memory_space<vmem>>, vector<1x32xf32>
    %262 = vector.broadcast %261 : vector<1x32xf32> to vector<16x32xf32>
    %263 = arith.addf %260, %262 : vector<16x32xf32>
    %264 = arith.addf %263, %220 : vector<16x32xf32>
    %c0_101 = arith.constant 0 : index
    %c0_102 = arith.constant 0 : index
    %265 = vector.load %arg16[%c0_101, %c0_102] : memref<16x32xf32, #tpu.memory_space<vmem>>, vector<16x32xf32>
    tpu.vector_store %arg16[%c0_101, %c0_102], %264 {strides = array<i32>} : memref<16x32xf32, #tpu.memory_space<vmem>>, vector<16x32xf32>,
    return
  }
}

</mosaic_0001>

<llo_original>
// kernel: tpu_custom_call.1
$region0: #{tpu_custom_call.1}
  #allocation0 [shape = 'u32[]', space=smem, size = 0x4, offset = 0x4, fixed_abs, tag = 'smem constant byte address 0x4 - core index']
  #allocation1 [shape = 'u32[72,128]{1,0:T(1,128)}', space=vmem, size = 0x9000, scoped, tag = 'internal scratch']
  %s0 = inlined_call_operand.vmem [shape: f32[16,32], index: 0, kind: input, shape index: {}]
  %s1 = inlined_call_operand.vmem [shape: f32[48,16], index: 1, kind: input, shape index: {}]
  %s2 = inlined_call_operand.vmem [shape: s32[48,1], index: 2, kind: input, shape index: {}]
  %s3 = inlined_call_operand.vmem [shape: s32[1,48], index: 3, kind: input, shape index: {}]
  %s4 = inlined_call_operand.vmem [shape: f32[2,32], index: 4, kind: input, shape index: {}]
  %s5 = inlined_call_operand.vmem [shape: f32[32,128], index: 5, kind: input, shape index: {}]
  %s6 = inlined_call_operand.vmem [shape: f32[1,128], index: 6, kind: input, shape index: {}]
  %s7 = inlined_call_operand.vmem [shape: f32[16,32], index: 7, kind: input, shape index: {}]
  %s8 = inlined_call_operand.vmem [shape: f32[1,32], index: 8, kind: input, shape index: {}]
  %s9 = inlined_call_operand.vmem [shape: f32[32,32], index: 9, kind: input, shape index: {}]
  %s10 = inlined_call_operand.vmem [shape: f32[1,32], index: 10, kind: input, shape index: {}]
  %s11 = inlined_call_operand.vmem [shape: f32[2,32], index: 11, kind: input, shape index: {}]
  %s12 = inlined_call_operand.vmem [shape: f32[32,64], index: 12, kind: input, shape index: {}]
  %s13 = inlined_call_operand.vmem [shape: f32[1,64], index: 13, kind: input, shape index: {}]
  %s14 = inlined_call_operand.vmem [shape: f32[64,32], index: 14, kind: input, shape index: {}]
  %s15 = inlined_call_operand.vmem [shape: f32[1,32], index: 15, kind: input, shape index: {}]
  %s16 = inlined_call_operand.hbm [shape: f32[16,32], index: 16, kind: output, shape index: {}]
  %s17 = sld [smem:[#allocation0]]
  $region74: #{tpu_custom_call.1} parent=0
    _
  %s19 = ssub.s32 1, %s17
  %s20 = scalar_select 0, %s19, %s17
  $region1: #{tpu_custom_call.1} parent=0
    #allocation2 [shape = 'u8[8192]{0}', space=vmem, size = 0x2000, scoped, tag = 'output window, operand 0, single buffered']
    #allocation3 [shape = 's32[1]{0}', space=sflag, size = 0x4, scoped, tag = 'scoped memory for tpu_custom_call.1']
    %21 = vsyncpa [#allocation3], 0
    // Predicated region
    $region2: #{tpu_custom_call.1} parent=1 // pred_check
      _
    $region3: #{tpu_custom_call.1} parent=1 // pred_check_branch
      %23 = sbr.rel (0) target = $region5
    $region4: #{tpu_custom_call.1} parent=1 // pred_region
      _
    $region5: #{tpu_custom_call.1} parent=1 // pred_fallthru
      _
    // Predicated region
    $region6: #{tpu_custom_call.1} parent=1 // pred_check
      _
    $region7: #{tpu_custom_call.1} parent=1 // pred_check_branch
      %25 = sbr.rel (0) target = $region9
    $region8: #{tpu_custom_call.1} parent=1 // pred_region
      _
    $region9: #{tpu_custom_call.1} parent=1 // pred_fallthru
      _
    // Predicated region
    $region10: #{tpu_custom_call.1} parent=1 // pred_check
      _
    $region11: #{tpu_custom_call.1} parent=1 // pred_check_branch
      %27 = sbr.rel (0) target = $region13
    $region12: #{tpu_custom_call.1} parent=1 // pred_region
      _
    $region13: #{tpu_custom_call.1} parent=1 // pred_fallthru
      _
    // Predicated region
    $region14: #{tpu_custom_call.1} parent=1 // pred_check
      _
    $region15: #{tpu_custom_call.1} parent=1 // pred_check_branch
      %29 = sbr.rel (0) target = $region17
    $region16: #{tpu_custom_call.1} parent=1 // pred_region
      _
    $region17: #{tpu_custom_call.1} parent=1 // pred_fallthru
      _
    // Predicated region
    $region18: #{tpu_custom_call.1} parent=1 // pred_check
      _
    $region19: #{tpu_custom_call.1} parent=1 // pred_check_branch
      %31 = sbr.rel (0) target = $region21
    $region20: #{tpu_custom_call.1} parent=1 // pred_region
      _
    $region21: #{tpu_custom_call.1} parent=1 // pred_fallthru
      _
    // Predicated region
    $region22: #{tpu_custom_call.1} parent=1 // pred_check
      _
    $region23: #{tpu_custom_call.1} parent=1 // pred_check_branch
      %33 = sbr.rel (0) target = $region25
    $region24: #{tpu_custom_call.1} parent=1 // pred_region
      _
    $region25: #{tpu_custom_call.1} parent=1 // pred_fallthru
      _
    // Predicated region
    $region26: #{tpu_custom_call.1} parent=1 // pred_check
      _
    $region27: #{tpu_custom_call.1} parent=1 // pred_check_branch
      %35 = sbr.rel (0) target = $region29
    $region28: #{tpu_custom_call.1} parent=1 // pred_region
      _
    $region29: #{tpu_custom_call.1} parent=1 // pred_fallthru
      _
    // Predicated region
    $region30: #{tpu_custom_call.1} parent=1 // pred_check
      _
    $region31: #{tpu_custom_call.1} parent=1 // pred_check_branch
      %37 = sbr.rel (0) target = $region33
    $region32: #{tpu_custom_call.1} parent=1 // pred_region
      _
    $region33: #{tpu_custom_call.1} parent=1 // pred_fallthru
      _
    // Predicated region
    $region34: #{tpu_custom_call.1} parent=1 // pred_check
      _
    $region35: #{tpu_custom_call.1} parent=1 // pred_check_branch
      %39 = sbr.rel (0) target = $region37
    $region36: #{tpu_custom_call.1} parent=1 // pred_region
      _
    $region37: #{tpu_custom_call.1} parent=1 // pred_fallthru
      _
    // Predicated region
    $region38: #{tpu_custom_call.1} parent=1 // pred_check
      _
    $region39: #{tpu_custom_call.1} parent=1 // pred_check_branch
      %41 = sbr.rel (0) target = $region41
    $region40: #{tpu_custom_call.1} parent=1 // pred_region
      _
    $region41: #{tpu_custom_call.1} parent=1 // pred_fallthru
      _
    // Predicated region
    $region42: #{tpu_custom_call.1} parent=1 // pred_check
      _
    $region43: #{tpu_custom_call.1} parent=1 // pred_check_branch
      %43 = sbr.rel (0) target = $region45
    $region44: #{tpu_custom_call.1} parent=1 // pred_region
      _
    $region45: #{tpu_custom_call.1} parent=1 // pred_fallthru
      _
    // Predicated region
    $region46: #{tpu_custom_call.1} parent=1 // pred_check
      _
    $region47: #{tpu_custom_call.1} parent=1 // pred_check_branch
      %45 = sbr.rel (0) target = $region49
    $region48: #{tpu_custom_call.1} parent=1 // pred_region
      _
    $region49: #{tpu_custom_call.1} parent=1 // pred_fallthru
      _
    // Predicated region
    $region50: #{tpu_custom_call.1} parent=1 // pred_check
      _
    $region51: #{tpu_custom_call.1} parent=1 // pred_check_branch
      %47 = sbr.rel (0) target = $region53
    $region52: #{tpu_custom_call.1} parent=1 // pred_region
      _
    $region53: #{tpu_custom_call.1} parent=1 // pred_fallthru
      _
    // Predicated region
    $region54: #{tpu_custom_call.1} parent=1 // pred_check
      _
    $region55: #{tpu_custom_call.1} parent=1 // pred_check_branch
      %49 = sbr.rel (0) target = $region57
    $region56: #{tpu_custom_call.1} parent=1 // pred_region
      _
    $region57: #{tpu_custom_call.1} parent=1 // pred_fallthru
      _
    // Predicated region
    $region58: #{tpu_custom_call.1} parent=1 // pred_check
      _
    $region59: #{tpu_custom_call.1} parent=1 // pred_check_branch
      %51 = sbr.rel (0) target = $region61
    $region60: #{tpu_custom_call.1} parent=1 // pred_region
      _
    $region61: #{tpu_custom_call.1} parent=1 // pred_fallthru
      _
    // Predicated region
    $region62: #{tpu_custom_call.1} parent=1 // pred_check
      _
    $region63: #{tpu_custom_call.1} parent=1 // pred_check_branch
      %53 = sbr.rel (0) target = $region65
    $region64: #{tpu_custom_call.1} parent=1 // pred_region
      _
    $region65: #{tpu_custom_call.1} parent=1 // pred_fallthru
      _
    %v54 = vld [vmem:[%s0] sm:$0xff]
    %v55 = vld [vmem:[%s0 + $0x8] sm:$0xff]
    %vm56 = vcmask 261120
    %v57 = vsel %vm56, %v54, 0.0
    %58 = vadd.xlane.f32.xlu0 %v57
    %v59 = vpop.xlane.xlu0 %58
    %v60 = vsel %vm56, %v55, 0.0
    %61 = vadd.xlane.f32.xlu0 %v60
    %v62 = vpop.xlane.xlu0 %61
    %v63 = vrcp.pop 32.0
    %v64 = vmul.f32 32.0, %v63
    %v65 = vsub.f32 1.0, %v64
    %v66 = vmul.f32 %v63, %v65
    %v67 = vadd.f32 %v63, %v66
    %vm68 = vweird.f32 %v63
    %v69 = vsel %vm68, %v63, %v67
    %v70 = vmul.f32 %v59, %v69
    %v71 = vmul.f32 %v62, %v69
    %v72 = vsub.f32 %v54, %v70
    %v73 = vsub.f32 %v55, %v71
    %v74 = vmul.f32 %v72, %v72
    %v75 = vmul.f32 %v73, %v73
    %v76 = vsel %vm56, %v74, 0.0
    %77 = vadd.xlane.f32.xlu0 %v76
    %v78 = vpop.xlane.xlu0 %77
    %v79 = vsel %vm56, %v75, 0.0
    %80 = vadd.xlane.f32.xlu0 %v79
    %v81 = vpop.xlane.xlu0 %80
    %v82 = vmul.f32 %v78, %v69
    %v83 = vmul.f32 %v81, %v69
    %v84 = vadd.f32 %v82, 1e-05
    %v85 = vadd.f32 %v83, 1e-05
    %v86 = vrsqrt.pop %v84
    %v87 = vmul.f32 %v86, %v84
    %v88 = vmul.f32 %v87, %v86
    %v89 = vmul.f32 0.5, %v88
    %v90 = vsub.f32 1.5, %v89
    %v91 = vmul.f32 %v86, %v90
    %vm92 = vweird.f32 %v84
    %vm93 = vweird.f32 %v86
    %vm94 = vmor %vm92, %vm93
    %v95 = vsel %vm94, %v86, %v91
    %v96 = vrsqrt.pop %v85
    %v97 = vmul.f32 %v96, %v85
    %v98 = vmul.f32 %v97, %v96
    %v99 = vmul.f32 0.5, %v98
    %v100 = vsub.f32 1.5, %v99
    %v101 = vmul.f32 %v96, %v100
    %vm102 = vweird.f32 %v85
    %vm103 = vweird.f32 %v96
    %vm104 = vmor %vm102, %vm103
    %v105 = vsel %vm104, %v96, %v101
    %v106 = vmul.f32 %v72, %v95
    %v107 = vmul.f32 %v73, %v105
    %v108 = vld [vmem:[%s4] sm:$0x1]
    %v109 = vperm.slane %v108, 0
    %v110 = vmul.f32 %v106, %v109
    %v111 = vmul.f32 %v107, %v109
    %v112 = vld [vmem:[%s4 + $0x1] sm:$0x1]
    %v113 = vperm.slane %v112, 0
    %v114 = vadd.f32 %v110, %v113
    %v115 = vadd.f32 %v111, %v113
    %v116 = vld [vmem:[%s5] sm:$0xff]
    %v117 = vld [vmem:[%s5 + $0x8] sm:$0xff]
    %v118 = vld [vmem:[%s5 + $0x10] sm:$0xff]
    %v119 = vld [vmem:[%s5 + $0x18] sm:$0xff]
    %v120 = vld [vmem:[%s6] sm:$0x1]
    %v122 = vperm.slane %v120, 0
    %v125 = vsel %vm56, %v114, 0
    %v128 = vsel %vm56, %v115, 0
    %130 = vmatpush.msra.mxu0 0.0
    %131 = vmatpush.msra.mxu0 0.0
    %132 = vmatpush.msra.mxu0 0.0
    %133 = vmatpush.msra.mxu0 0.0
    %134 = vmatpush.msra.mxu0 0.0
    %135 = vmatpush.msra.mxu0 0.0
    %136 = vmatpush.msra.mxu0 0.0
    %137 = vmatpush.msra.mxu0 0.0
    %138 = vmatpush.msra.mxu0 0.0
    %139 = vmatpush.msra.mxu0 0.0
    %140 = vmatpush.msra.mxu0 0.0
    %141 = vmatpush.msra.mxu0 0.0
    %142 = vmatpush.msra.mxu0 %v119
    %143 = vmatpush.msra.mxu0 %v118
    %144 = vmatpush.msra.mxu0 %v117
    %145 = vmatpush.msra.mxu0 %v116
    %146 = vmatmul.f32.gmra.mxu0 %v125
    %v147 = vpop.f32.mrf.mxu0
    %v148 = vadd.f32 %v122, %v147
    %149 = vmatmul.f32.gmra.mxu0 %v128
    %v150 = vpop.f32.mrf.mxu0
    %v151 = vadd.f32 %v122, %v150
    %152 = vdwg.mxu0
    %v153 = vld [vmem:[%s1] sm:$0xff]
    %v154 = vld [vmem:[%s1 + $0x8] sm:$0xff]
    %v155 = vld [vmem:[%s1 + $0x10] sm:$0xff]
    %v156 = vld [vmem:[%s1 + $0x18] sm:$0xff]
    %v157 = vld [vmem:[%s1 + $0x20] sm:$0xff]
    %v158 = vld [vmem:[%s1 + $0x28] sm:$0xff]
    %v159 = vld [vmem:[%s7] sm:$0xff]
    %v160 = vld [vmem:[%s7 + $0x8] sm:$0xff]
    %v161 = vld [vmem:[%s8] sm:$0x1]
    %v163 = vperm.slane %v161, 0
    %vm165 = vcmask 130048
    %v167 = vsel %vm165, %v153, 0
    %v170 = vsel %vm165, %v154, 0
    %v173 = vsel %vm165, %v155, 0
    %v176 = vsel %vm165, %v156, 0
    %v179 = vsel %vm165, %v157, 0
    %v182 = vsel %vm165, %v158, 0
    %184 = vmatpush.msra.mxu0 0.0
    %185 = vmatpush.msra.mxu0 0.0
    %186 = vmatpush.msra.mxu0 0.0
    %187 = vmatpush.msra.mxu0 0.0
    %188 = vmatpush.msra.mxu0 0.0
    %189 = vmatpush.msra.mxu0 0.0
    %190 = vmatpush.msra.mxu0 0.0
    %191 = vmatpush.msra.mxu0 0.0
    %192 = vmatpush.msra.mxu0 0.0
    %193 = vmatpush.msra.mxu0 0.0
    %194 = vmatpush.msra.mxu0 0.0
    %195 = vmatpush.msra.mxu0 0.0
    %196 = vmatpush.msra.mxu0 0.0
    %197 = vmatpush.msra.mxu0 0.0
    %198 = vmatpush.msra.mxu0 %v160
    %199 = vmatpush.msra.mxu0 %v159
    %200 = vmatmul.f32.gmra.mxu0 %v167
    %v201 = vpop.f32.mrf.mxu0
    %v202 = vadd.f32 %v163, %v201
    %203 = vmatmul.f32.gmra.mxu0 %v170
    %v204 = vpop.f32.mrf.mxu0
    %v205 = vadd.f32 %v163, %v204
    %206 = vmatmul.f32.gmra.mxu0 %v173
    %v207 = vpop.f32.mrf.mxu0
    %v208 = vadd.f32 %v163, %v207
    %209 = vmatmul.f32.gmra.mxu0 %v176
    %v210 = vpop.f32.mrf.mxu0
    %v211 = vadd.f32 %v163, %v210
    %212 = vmatmul.f32.gmra.mxu0 %v179
    %v213 = vpop.f32.mrf.mxu0
    %v214 = vadd.f32 %v163, %v213
    %215 = vmatmul.f32.gmra.mxu0 %v182
    %v216 = vpop.f32.mrf.mxu0
    %v217 = vadd.f32 %v163, %v216
    %218 = vdwg.mxu0
    %v219 = vld [vmem:[%s2] sm:$0xff]
    %v220 = vld [vmem:[%s2 + $0x8] sm:$0xff]
    %v221 = vld [vmem:[%s2 + $0x10] sm:$0xff]
    %v222 = vld [vmem:[%s2 + $0x18] sm:$0xff]
    %v223 = vld [vmem:[%s2 + $0x20] sm:$0xff]
    %v224 = vld [vmem:[%s2 + $0x28] sm:$0xff]
    %v225 = vlaneseq
    %v226 = vand.u32 %v225, 127
    %227 = vset.pattern.permute.xlu0 0
    %228 = vperm.xlu0 %227, %v219
    %v229 = vpop.permute.xlu0 %228
    %230 = vset.pattern.permute.xlu0 0
    %231 = vperm.xlu0 %230, %v220
    %v232 = vpop.permute.xlu0 %231
    %233 = vset.pattern.permute.xlu0 0
    %234 = vperm.xlu0 %233, %v221
    %v235 = vpop.permute.xlu0 %234
    %236 = vset.pattern.permute.xlu0 0
    %237 = vperm.xlu0 %236, %v222
    %v238 = vpop.permute.xlu0 %237
    %239 = vset.pattern.permute.xlu0 0
    %240 = vperm.xlu0 %239, %v223
    %v241 = vpop.permute.xlu0 %240
    %242 = vset.pattern.permute.xlu0 0
    %243 = vperm.xlu0 %242, %v224
    %v244 = vpop.permute.xlu0 %243
    %vm245 = vcmp.eq.s32.totalorder %v226, %v229
    %vm246 = vcmp.eq.s32.totalorder %v226, %v232
    %vm247 = vcmp.eq.s32.totalorder %v226, %v235
    %vm248 = vcmp.eq.s32.totalorder %v226, %v238
    %vm249 = vcmp.eq.s32.totalorder %v226, %v241
    %vm250 = vcmp.eq.s32.totalorder %v226, %v244
    %v251 = vsel %vm245, 1, 0
    %v252 = vsel %vm246, 1, 0
    %v253 = vsel %vm247, 1, 0
    %v254 = vsel %vm248, 1, 0
    %v255 = vsel %vm249, 1, 0
    %v256 = vsel %vm250, 1, 0
    %v257 = vcvt.s32.f32 %v251
    %v258 = vcvt.s32.f32 %v252
    %v259 = vcvt.s32.f32 %v253
    %v260 = vcvt.s32.f32 %v254
    %v261 = vcvt.s32.f32 %v255
    %v262 = vcvt.s32.f32 %v256
    %265 = vrot.lane.b32.xlu0 %v148, 96
    %v266 = vpop.permute.xlu0 %265
    %267 = vrot.lane.b32.xlu0 %v151, 96
    %v268 = vpop.permute.xlu0 %267
    %v272 = vsel %vm165, %v257, 0
    %v275 = vsel %vm165, %v258, 0
    %v278 = vsel %vm165, %v259, 0
    %v281 = vsel %vm165, %v260, 0
    %v284 = vsel %vm165, %v261, 0
    %v287 = vsel %vm165, %v262, 0
    %289 = vmatpush.msra.mxu0 0.0
    %290 = vmatpush.msra.mxu0 0.0
    %291 = vmatpush.msra.mxu0 0.0
    %292 = vmatpush.msra.mxu0 0.0
    %293 = vmatpush.msra.mxu0 0.0
    %294 = vmatpush.msra.mxu0 0.0
    %295 = vmatpush.msra.mxu0 0.0
    %296 = vmatpush.msra.mxu0 0.0
    %297 = vmatpush.msra.mxu0 0.0
    %298 = vmatpush.msra.mxu0 0.0
    %299 = vmatpush.msra.mxu0 0.0
    %300 = vmatpush.msra.mxu0 0.0
    %301 = vmatpush.msra.mxu0 0.0
    %302 = vmatpush.msra.mxu0 0.0
    %303 = vmatpush.msra.mxu0 %v268
    %304 = vmatpush.msra.mxu0 %v266
    %305 = vmatmul.f32.gmra.mxu0 %v272
    %v306 = vpop.f32.mrf.mxu0
    %v307 = vadd.f32 %v202, %v306
    %308 = vmatmul.f32.gmra.mxu0 %v275
    %v309 = vpop.f32.mrf.mxu0
    %v310 = vadd.f32 %v205, %v309
    %311 = vmatmul.f32.gmra.mxu0 %v278
    %v312 = vpop.f32.mrf.mxu0
    %v313 = vadd.f32 %v208, %v312
    %314 = vmatmul.f32.gmra.mxu0 %v281
    %v315 = vpop.f32.mrf.mxu0
    %v316 = vadd.f32 %v211, %v315
    %317 = vmatmul.f32.gmra.mxu0 %v284
    %v318 = vpop.f32.mrf.mxu0
    %v319 = vadd.f32 %v214, %v318
    %320 = vmatmul.f32.gmra.mxu0 %v287
    %v321 = vpop.f32.mrf.mxu0
    %v322 = vadd.f32 %v217, %v321
    %323 = vdwg.mxu0
    %324 = vrot.lane.b32.xlu0 %v148, 64
    %v325 = vpop.permute.xlu0 %324
    %326 = vrot.lane.b32.xlu0 %v151, 64
    %v327 = vpop.permute.xlu0 %326
    %330 = vmatpush.msra.mxu0 0.0
    %331 = vmatpush.msra.mxu0 0.0
    %332 = vmatpush.msra.mxu0 0.0
    %333 = vmatpush.msra.mxu0 0.0
    %334 = vmatpush.msra.mxu0 0.0
    %335 = vmatpush.msra.mxu0 0.0
    %336 = vmatpush.msra.mxu0 0.0
    %337 = vmatpush.msra.mxu0 0.0
    %338 = vmatpush.msra.mxu0 0.0
    %339 = vmatpush.msra.mxu0 0.0
    %340 = vmatpush.msra.mxu0 0.0
    %341 = vmatpush.msra.mxu0 0.0
    %342 = vmatpush.msra.mxu0 0.0
    %343 = vmatpush.msra.mxu0 0.0
    %344 = vmatpush.msra.mxu0 %v327
    %345 = vmatpush.msra.mxu0 %v325
    %346 = vmatmul.f32.gmra.mxu0 %v272
    %v347 = vpop.f32.mrf.mxu0
    %v348 = vadd.f32 %v202, %v347
    %349 = vmatmul.f32.gmra.mxu0 %v275
    %v350 = vpop.f32.mrf.mxu0
    %v351 = vadd.f32 %v205, %v350
    %352 = vmatmul.f32.gmra.mxu0 %v278
    %v353 = vpop.f32.mrf.mxu0
    %v354 = vadd.f32 %v208, %v353
    %355 = vmatmul.f32.gmra.mxu0 %v281
    %v356 = vpop.f32.mrf.mxu0
    %v357 = vadd.f32 %v211, %v356
    %358 = vmatmul.f32.gmra.mxu0 %v284
    %v359 = vpop.f32.mrf.mxu0
    %v360 = vadd.f32 %v214, %v359
    %361 = vmatmul.f32.gmra.mxu0 %v287
    %v362 = vpop.f32.mrf.mxu0
    %v363 = vadd.f32 %v217, %v362
    %364 = vdwg.mxu0
    %v365 = vld [vmem:[%s3] sm:$0x1]
    %v366 = vlaneseq
    %v367 = vshrl.u32 %v366, 7
    %v368 = vadd.s32 %v367, 8
    %v369 = vperm.slane %v365, 0
    %vm370 = vcmp.eq.s32.totalorder %v367, %v369
    %vm371 = vcmp.eq.s32.totalorder %v368, %v369
    %v372 = vsel %vm370, 1, 0
    %v373 = vsel %vm371, 1, 0
    %v374 = vcvt.s32.f32 %v372
    %v375 = vcvt.s32.f32 %v373
    %vm376 = vcmp.ge.s32.totalorder %v226, 0
    %vm377 = vcmp.lt.s32.totalorder %v226, 8
    %vm378 = vmand %vm376, %vm377
    %v379 = vsel %vm378, 1, 0
    %v380 = vcvt.s32.f32 %v379
    %v381 = vmul.f32 %v148, %v380
    %v382 = vmul.f32 %v151, %v380
    %v384 = vsel %vm56, %v381, 0
    %v387 = vsel %vm56, %v382, 0
    %v390 = vsel %vm56, %v307, 0
    %v393 = vsel %vm56, %v310, 0
    %v396 = vsel %vm56, %v313, 0
    %v399 = vsel %vm56, %v316, 0
    %v402 = vsel %vm56, %v319, 0
    %v405 = vsel %vm56, %v322, 0
    %407 = vmatpush.xpose.msra.mxu0 0.0
    %408 = vmatpush.xpose.msra.mxu0 0.0
    %409 = vmatpush.xpose.msra.mxu0 0.0
    %410 = vmatpush.xpose.msra.mxu0 0.0
    %411 = vmatpush.xpose.msra.mxu0 0.0
    %412 = vmatpush.xpose.msra.mxu0 0.0
    %413 = vmatpush.xpose.msra.mxu0 0.0
    %414 = vmatpush.xpose.msra.mxu0 0.0
    %415 = vmatpush.xpose.msra.mxu0 0.0
    %416 = vmatpush.xpose.msra.mxu0 0.0
    %417 = vmatpush.xpose.msra.mxu0 %v405
    %418 = vmatpush.xpose.msra.mxu0 %v402
    %419 = vmatpush.xpose.msra.mxu0 %v399
    %420 = vmatpush.xpose.msra.mxu0 %v396
    %421 = vmatpush.xpose.msra.mxu0 %v393
    %422 = vmatpush.xpose.msra.mxu0 %v390
    %423 = vmatmul.f32.gmra.mxu0 %v384
    %v424 = vpop.f32.mrf.mxu0
    %v425 = vadd.f32 0.0, %v424
    %426 = vmatmul.f32.gmra.mxu0 %v387
    %v427 = vpop.f32.mrf.mxu0
    %v428 = vadd.f32 0.0, %v427
    %429 = vdwg.mxu0
    %v430 = vmul.f32 %v425, 0.35355338
    %v431 = vmul.f32 %v428, 0.35355338
    %vm432 = vcmp.gt.f32.partialorder %v374, 0.0
    %vm433 = vcmp.gt.f32.partialorder %v375, 0.0
    %v434 = vsel %vm432, %v430, -1e+30
    %v435 = vsel %vm433, %v431, -1e+30
    %vm436 = vcmask 392192
    %v437 = vsel %vm436, %v434, -inf
    %438 = vmax.xlane.f32.xlu0 %v437
    %v439 = vpop.xlane.xlu0 %438
    %v440 = vsel %vm436, %v435, -inf
    %441 = vmax.xlane.f32.xlu0 %v440
    %v442 = vpop.xlane.xlu0 %441
    %vm443 = vcmp.le.f32.partialorder %v439, -1e+29
    %vm444 = vcmp.le.f32.partialorder %v442, -1e+29
    %v445 = vsel %vm443, 0.0, %v439
    %v446 = vsel %vm444, 0.0, %v442
    %v447 = vsub.f32 %v434, %v445
    %v448 = vsub.f32 %v435, %v446
    %v449 = vmul.f32 %v447, 1.442695
    %v450 = vpow.pop %v449
    %v451 = vmul.f32 %v448, 1.442695
    %v452 = vpow.pop %v451
    %v453 = vmul.f32 %v450, %v374
    %v454 = vmul.f32 %v452, %v375
    %v455 = vsel %vm436, %v453, 0.0
    %456 = vadd.xlane.f32.xlu0 %v455
    %v457 = vpop.xlane.xlu0 %456
    %v458 = vsel %vm436, %v454, 0.0
    %459 = vadd.xlane.f32.xlu0 %v458
    %v460 = vpop.xlane.xlu0 %459
    %vm461 = vcmp.eq.f32.partialorder %v457, 0.0
    %vm462 = vcmp.eq.f32.partialorder %v460, 0.0
    %v463 = vsel %vm461, 1.0, %v457
    %v464 = vsel %vm462, 1.0, %v460
    %v465 = vrcp.pop %v463
    %v466 = vrcp.pop %v464
    %v467 = vmul.f32 %v453, %v465
    %v468 = vmul.f32 %v454, %v466
    %v469 = vmul.f32 %v348, %v380
    %v470 = vmul.f32 %v351, %v380
    %v471 = vmul.f32 %v354, %v380
    %v472 = vmul.f32 %v357, %v380
    %v473 = vmul.f32 %v360, %v380
    %v474 = vmul.f32 %v363, %v380
    %vm475 = vcmp.ge.s32.totalorder %v226, 8
    %vm476 = vcmp.lt.s32.totalorder %v226, 16
    %vm477 = vmand %vm475, %vm476
    %v478 = vsel %vm477, 1, 0
    %v479 = vcvt.s32.f32 %v478
    %v480 = vmul.f32 %v148, %v479
    %v481 = vmul.f32 %v151, %v479
    %v483 = vsel %vm56, %v480, 0
    %v486 = vsel %vm56, %v481, 0
    %488 = vmatpush.xpose.msra.mxu0 0.0
    %489 = vmatpush.xpose.msra.mxu0 0.0
    %490 = vmatpush.xpose.msra.mxu0 0.0
    %491 = vmatpush.xpose.msra.mxu0 0.0
    %492 = vmatpush.xpose.msra.mxu0 0.0
    %493 = vmatpush.xpose.msra.mxu0 0.0
    %494 = vmatpush.xpose.msra.mxu0 0.0
    %495 = vmatpush.xpose.msra.mxu0 0.0
    %496 = vmatpush.xpose.msra.mxu0 0.0
    %497 = vmatpush.xpose.msra.mxu0 0.0
    %498 = vmatpush.xpose.msra.mxu0 %v405
    %499 = vmatpush.xpose.msra.mxu0 %v402
    %500 = vmatpush.xpose.msra.mxu0 %v399
    %501 = vmatpush.xpose.msra.mxu0 %v396
    %502 = vmatpush.xpose.msra.mxu0 %v393
    %503 = vmatpush.xpose.msra.mxu0 %v390
    %504 = vmatmul.f32.gmra.mxu0 %v483
    %v505 = vpop.f32.mrf.mxu0
    %v506 = vadd.f32 0.0, %v505
    %507 = vmatmul.f32.gmra.mxu0 %v486
    %v508 = vpop.f32.mrf.mxu0
    %v509 = vadd.f32 0.0, %v508
    %510 = vdwg.mxu0
    %v511 = vmul.f32 %v506, 0.35355338
    %v512 = vmul.f32 %v509, 0.35355338
    %v513 = vsel %vm432, %v511, -1e+30
    %v514 = vsel %vm433, %v512, -1e+30
    %v515 = vsel %vm436, %v513, -inf
    %516 = vmax.xlane.f32.xlu0 %v515
    %v517 = vpop.xlane.xlu0 %516
    %v518 = vsel %vm436, %v514, -inf
    %519 = vmax.xlane.f32.xlu0 %v518
    %v520 = vpop.xlane.xlu0 %519
    %vm521 = vcmp.le.f32.partialorder %v517, -1e+29
    %vm522 = vcmp.le.f32.partialorder %v520, -1e+29
    %v523 = vsel %vm521, 0.0, %v517
    %v524 = vsel %vm522, 0.0, %v520
    %v525 = vsub.f32 %v513, %v523
    %v526 = vsub.f32 %v514, %v524
    %v527 = vmul.f32 %v525, 1.442695
    %v528 = vpow.pop %v527
    %v529 = vmul.f32 %v526, 1.442695
    %v530 = vpow.pop %v529
    %v531 = vmul.f32 %v528, %v374
    %v532 = vmul.f32 %v530, %v375
    %v533 = vsel %vm436, %v531, 0.0
    %534 = vadd.xlane.f32.xlu0 %v533
    %v535 = vpop.xlane.xlu0 %534
    %v536 = vsel %vm436, %v532, 0.0
    %537 = vadd.xlane.f32.xlu0 %v536
    %v538 = vpop.xlane.xlu0 %537
    %vm539 = vcmp.eq.f32.partialorder %v535, 0.0
    %vm540 = vcmp.eq.f32.partialorder %v538, 0.0
    %v541 = vsel %vm539, 1.0, %v535
    %v542 = vsel %vm540, 1.0, %v538
    %v543 = vrcp.pop %v541
    %v544 = vrcp.pop %v542
    %v545 = vmul.f32 %v531, %v543
    %v546 = vmul.f32 %v532, %v544
    %v547 = vmul.f32 %v348, %v479
    %v548 = vmul.f32 %v351, %v479
    %v549 = vmul.f32 %v354, %v479
    %v550 = vmul.f32 %v357, %v479
    %v551 = vmul.f32 %v360, %v479
    %v552 = vmul.f32 %v363, %v479
    %v554 = vsel %vm436, %v545, 0
    %v557 = vsel %vm436, %v546, 0
    %559 = vmatpush.msra.mxu0 0.0
    %560 = vmatpush.msra.mxu0 0.0
    %561 = vmatpush.msra.mxu0 0.0
    %562 = vmatpush.msra.mxu0 0.0
    %563 = vmatpush.msra.mxu0 0.0
    %564 = vmatpush.msra.mxu0 0.0
    %565 = vmatpush.msra.mxu0 0.0
    %566 = vmatpush.msra.mxu0 0.0
    %567 = vmatpush.msra.mxu0 0.0
    %568 = vmatpush.msra.mxu0 0.0
    %569 = vmatpush.msra.mxu0 %v552
    %570 = vmatpush.msra.mxu0 %v551
    %571 = vmatpush.msra.mxu0 %v550
    %572 = vmatpush.msra.mxu0 %v549
    %573 = vmatpush.msra.mxu0 %v548
    %574 = vmatpush.msra.mxu0 %v547
    %575 = vmatmul.f32.gmra.mxu0 %v554
    %v576 = vpop.f32.mrf.mxu0
    %v577 = vadd.f32 0.0, %v576
    %578 = vmatmul.f32.gmra.mxu0 %v557
    %v579 = vpop.f32.mrf.mxu0
    %v580 = vadd.f32 0.0, %v579
    %581 = vdwg.mxu0
    %v583 = vsel %vm436, %v467, 0
    %v586 = vsel %vm436, %v468, 0
    %588 = vmatpush.msra.mxu0 0.0
    %589 = vmatpush.msra.mxu0 0.0
    %590 = vmatpush.msra.mxu0 0.0
    %591 = vmatpush.msra.mxu0 0.0
    %592 = vmatpush.msra.mxu0 0.0
    %593 = vmatpush.msra.mxu0 0.0
    %594 = vmatpush.msra.mxu0 0.0
    %595 = vmatpush.msra.mxu0 0.0
    %596 = vmatpush.msra.mxu0 0.0
    %597 = vmatpush.msra.mxu0 0.0
    %598 = vmatpush.msra.mxu0 %v474
    %599 = vmatpush.msra.mxu0 %v473
    %600 = vmatpush.msra.mxu0 %v472
    %601 = vmatpush.msra.mxu0 %v471
    %602 = vmatpush.msra.mxu0 %v470
    %603 = vmatpush.msra.mxu0 %v469
    %604 = vmatmul.f32.gmra.mxu0 %v583
    %v605 = vpop.f32.mrf.mxu0
    %v606 = vadd.f32 %v577, %v605
    %607 = vmatmul.f32.gmra.mxu0 %v586
    %v608 = vpop.f32.mrf.mxu0
    %v609 = vadd.f32 %v580, %v608
    %610 = vdwg.mxu0
    %vm611 = vcmp.ge.s32.totalorder %v226, 16
    %vm612 = vcmp.lt.s32.totalorder %v226, 24
    %vm613 = vmand %vm611, %vm612
    %v614 = vsel %vm613, 1, 0
    %v615 = vcvt.s32.f32 %v614
    %v616 = vmul.f32 %v148, %v615
    %v617 = vmul.f32 %v151, %v615
    %v619 = vsel %vm56, %v616, 0
    %v622 = vsel %vm56, %v617, 0
    %624 = vmatpush.xpose.msra.mxu0 0.0
    %625 = vmatpush.xpose.msra.mxu0 0.0
    %626 = vmatpush.xpose.msra.mxu0 0.0
    %627 = vmatpush.xpose.msra.mxu0 0.0
    %628 = vmatpush.xpose.msra.mxu0 0.0
    %629 = vmatpush.xpose.msra.mxu0 0.0
    %630 = vmatpush.xpose.msra.mxu0 0.0
    %631 = vmatpush.xpose.msra.mxu0 0.0
    %632 = vmatpush.xpose.msra.mxu0 0.0
    %633 = vmatpush.xpose.msra.mxu0 0.0
    %634 = vmatpush.xpose.msra.mxu0 %v405
    %635 = vmatpush.xpose.msra.mxu0 %v402
    %636 = vmatpush.xpose.msra.mxu0 %v399
    %637 = vmatpush.xpose.msra.mxu0 %v396
    %638 = vmatpush.xpose.msra.mxu0 %v393
    %639 = vmatpush.xpose.msra.mxu0 %v390
    %640 = vmatmul.f32.gmra.mxu0 %v619
    %v641 = vpop.f32.mrf.mxu0
    %v642 = vadd.f32 0.0, %v641
    %643 = vmatmul.f32.gmra.mxu0 %v622
    %v644 = vpop.f32.mrf.mxu0
    %v645 = vadd.f32 0.0, %v644
    %646 = vdwg.mxu0
    %v647 = vmul.f32 %v642, 0.35355338
    %v648 = vmul.f32 %v645, 0.35355338
    %v649 = vsel %vm432, %v647, -1e+30
    %v650 = vsel %vm433, %v648, -1e+30
    %v651 = vsel %vm436, %v649, -inf
    %652 = vmax.xlane.f32.xlu0 %v651
    %v653 = vpop.xlane.xlu0 %652
    %v654 = vsel %vm436, %v650, -inf
    %655 = vmax.xlane.f32.xlu0 %v654
    %v656 = vpop.xlane.xlu0 %655
    %vm657 = vcmp.le.f32.partialorder %v653, -1e+29
    %vm658 = vcmp.le.f32.partialorder %v656, -1e+29
    %v659 = vsel %vm657, 0.0, %v653
    %v660 = vsel %vm658, 0.0, %v656
    %v661 = vsub.f32 %v649, %v659
    %v662 = vsub.f32 %v650, %v660
    %v663 = vmul.f32 %v661, 1.442695
    %v664 = vpow.pop %v663
    %v665 = vmul.f32 %v662, 1.442695
    %v666 = vpow.pop %v665
    %v667 = vmul.f32 %v664, %v374
    %v668 = vmul.f32 %v666, %v375
    %v669 = vsel %vm436, %v667, 0.0
    %670 = vadd.xlane.f32.xlu0 %v669
    %v671 = vpop.xlane.xlu0 %670
    %v672 = vsel %vm436, %v668, 0.0
    %673 = vadd.xlane.f32.xlu0 %v672
    %v674 = vpop.xlane.xlu0 %673
    %vm675 = vcmp.eq.f32.partialorder %v671, 0.0
    %vm676 = vcmp.eq.f32.partialorder %v674, 0.0
    %v677 = vsel %vm675, 1.0, %v671
    %v678 = vsel %vm676, 1.0, %v674
    %v679 = vrcp.pop %v677
    %v680 = vrcp.pop %v678
    %v681 = vmul.f32 %v667, %v679
    %v682 = vmul.f32 %v668, %v680
    %v683 = vmul.f32 %v348, %v615
    %v684 = vmul.f32 %v351, %v615
    %v685 = vmul.f32 %v354, %v615
    %v686 = vmul.f32 %v357, %v615
    %v687 = vmul.f32 %v360, %v615
    %v688 = vmul.f32 %v363, %v615
    %v690 = vsel %vm436, %v681, 0
    %v693 = vsel %vm436, %v682, 0
    %695 = vmatpush.msra.mxu0 0.0
    %696 = vmatpush.msra.mxu0 0.0
    %697 = vmatpush.msra.mxu0 0.0
    %698 = vmatpush.msra.mxu0 0.0
    %699 = vmatpush.msra.mxu0 0.0
    %700 = vmatpush.msra.mxu0 0.0
    %701 = vmatpush.msra.mxu0 0.0
    %702 = vmatpush.msra.mxu0 0.0
    %703 = vmatpush.msra.mxu0 0.0
    %704 = vmatpush.msra.mxu0 0.0
    %705 = vmatpush.msra.mxu0 %v688
    %706 = vmatpush.msra.mxu0 %v687
    %707 = vmatpush.msra.mxu0 %v686
    %708 = vmatpush.msra.mxu0 %v685
    %709 = vmatpush.msra.mxu0 %v684
    %710 = vmatpush.msra.mxu0 %v683
    %711 = vmatmul.f32.gmra.mxu0 %v690
    %v712 = vpop.f32.mrf.mxu0
    %v713 = vadd.f32 0.0, %v712
    %714 = vmatmul.f32.gmra.mxu0 %v693
    %v715 = vpop.f32.mrf.mxu0
    %v716 = vadd.f32 0.0, %v715
    %717 = vdwg.mxu0
    %v718 = vadd.f32 %v606, %v713
    %v719 = vadd.f32 %v609, %v716
    %vm720 = vcmp.ge.s32.totalorder %v226, 24
    %vm721 = vcmp.lt.s32.totalorder %v226, 32
    %vm722 = vmand %vm720, %vm721
    %v723 = vsel %vm722, 1, 0
    %v724 = vcvt.s32.f32 %v723
    %v725 = vmul.f32 %v148, %v724
    %v726 = vmul.f32 %v151, %v724
    %v728 = vsel %vm56, %v725, 0
    %v731 = vsel %vm56, %v726, 0
    %733 = vmatpush.xpose.msra.mxu0 0.0
    %734 = vmatpush.xpose.msra.mxu0 0.0
    %735 = vmatpush.xpose.msra.mxu0 0.0
    %736 = vmatpush.xpose.msra.mxu0 0.0
    %737 = vmatpush.xpose.msra.mxu0 0.0
    %738 = vmatpush.xpose.msra.mxu0 0.0
    %739 = vmatpush.xpose.msra.mxu0 0.0
    %740 = vmatpush.xpose.msra.mxu0 0.0
    %741 = vmatpush.xpose.msra.mxu0 0.0
    %742 = vmatpush.xpose.msra.mxu0 0.0
    %743 = vmatpush.xpose.msra.mxu0 %v405
    %744 = vmatpush.xpose.msra.mxu0 %v402
    %745 = vmatpush.xpose.msra.mxu0 %v399
    %746 = vmatpush.xpose.msra.mxu0 %v396
    %747 = vmatpush.xpose.msra.mxu0 %v393
    %748 = vmatpush.xpose.msra.mxu0 %v390
    %749 = vmatmul.f32.gmra.mxu0 %v728
    %v750 = vpop.f32.mrf.mxu0
    %v751 = vadd.f32 0.0, %v750
    %752 = vmatmul.f32.gmra.mxu0 %v731
    %v753 = vpop.f32.mrf.mxu0
    %v754 = vadd.f32 0.0, %v753
    %755 = vdwg.mxu0
    %v756 = vmul.f32 %v751, 0.35355338
    %v757 = vmul.f32 %v754, 0.35355338
    %v758 = vsel %vm432, %v756, -1e+30
    %v759 = vsel %vm433, %v757, -1e+30
    %v760 = vsel %vm436, %v758, -inf
    %761 = vmax.xlane.f32.xlu0 %v760
    %v762 = vpop.xlane.xlu0 %761
    %v763 = vsel %vm436, %v759, -inf
    %764 = vmax.xlane.f32.xlu0 %v763
    %v765 = vpop.xlane.xlu0 %764
    %vm766 = vcmp.le.f32.partialorder %v762, -1e+29
    %vm767 = vcmp.le.f32.partialorder %v765, -1e+29
    %v768 = vsel %vm766, 0.0, %v762
    %v769 = vsel %vm767, 0.0, %v765
    %v770 = vsub.f32 %v758, %v768
    %v771 = vsub.f32 %v759, %v769
    %v772 = vmul.f32 %v770, 1.442695
    %v773 = vpow.pop %v772
    %v774 = vmul.f32 %v771, 1.442695
    %v775 = vpow.pop %v774
    %v776 = vmul.f32 %v773, %v374
    %v777 = vmul.f32 %v775, %v375
    %v778 = vsel %vm436, %v776, 0.0
    %779 = vadd.xlane.f32.xlu0 %v778
    %v780 = vpop.xlane.xlu0 %779
    %v781 = vsel %vm436, %v777, 0.0
    %782 = vadd.xlane.f32.xlu0 %v781
    %v783 = vpop.xlane.xlu0 %782
    %vm784 = vcmp.eq.f32.partialorder %v780, 0.0
    %vm785 = vcmp.eq.f32.partialorder %v783, 0.0
    %v786 = vsel %vm784, 1.0, %v780
    %v787 = vsel %vm785, 1.0, %v783
    %v788 = vrcp.pop %v786
    %v789 = vrcp.pop %v787
    %v790 = vmul.f32 %v776, %v788
    %v791 = vmul.f32 %v777, %v789
    %v792 = vmul.f32 %v348, %v724
    %v793 = vmul.f32 %v351, %v724
    %v794 = vmul.f32 %v354, %v724
    %v795 = vmul.f32 %v357, %v724
    %v796 = vmul.f32 %v360, %v724
    %v797 = vmul.f32 %v363, %v724
    %v799 = vsel %vm436, %v790, 0
    %v802 = vsel %vm436, %v791, 0
    %804 = vmatpush.msra.mxu0 0.0
    %805 = vmatpush.msra.mxu0 0.0
    %806 = vmatpush.msra.mxu0 0.0
    %807 = vmatpush.msra.mxu0 0.0
    %808 = vmatpush.msra.mxu0 0.0
    %809 = vmatpush.msra.mxu0 0.0
    %810 = vmatpush.msra.mxu0 0.0
    %811 = vmatpush.msra.mxu0 0.0
    %812 = vmatpush.msra.mxu0 0.0
    %813 = vmatpush.msra.mxu0 0.0
    %814 = vmatpush.msra.mxu0 %v797
    %815 = vmatpush.msra.mxu0 %v796
    %816 = vmatpush.msra.mxu0 %v795
    %817 = vmatpush.msra.mxu0 %v794
    %818 = vmatpush.msra.mxu0 %v793
    %819 = vmatpush.msra.mxu0 %v792
    %820 = vmatmul.f32.gmra.mxu0 %v799
    %v821 = vpop.f32.mrf.mxu0
    %v822 = vadd.f32 0.0, %v821
    %823 = vmatmul.f32.gmra.mxu0 %v802
    %v824 = vpop.f32.mrf.mxu0
    %v825 = vadd.f32 0.0, %v824
    %826 = vdwg.mxu0
    %v827 = vadd.f32 %v718, %v822
    %v828 = vadd.f32 %v719, %v825
    %829 = vrot.lane.b32.xlu0 %v148, 32
    %v830 = vpop.permute.xlu0 %829
    %831 = vrot.lane.b32.xlu0 %v151, 32
    %v832 = vpop.permute.xlu0 %831
    %v835 = vadd.f32 %v827, %v830
    %v836 = vadd.f32 %v828, %v832
    %v837 = vld [vmem:[%s9] sm:$0xff]
    %v838 = vld [vmem:[%s9 + $0x8] sm:$0xff]
    %v839 = vld [vmem:[%s9 + $0x10] sm:$0xff]
    %v840 = vld [vmem:[%s9 + $0x18] sm:$0xff]
    %v841 = vld [vmem:[%s10] sm:$0x1]
    %v843 = vperm.slane %v841, 0
    %v846 = vsel %vm56, %v835, 0
    %v849 = vsel %vm56, %v836, 0
    %851 = vmatpush.msra.mxu0 0.0
    %852 = vmatpush.msra.mxu0 0.0
    %853 = vmatpush.msra.mxu0 0.0
    %854 = vmatpush.msra.mxu0 0.0
    %855 = vmatpush.msra.mxu0 0.0
    %856 = vmatpush.msra.mxu0 0.0
    %857 = vmatpush.msra.mxu0 0.0
    %858 = vmatpush.msra.mxu0 0.0
    %859 = vmatpush.msra.mxu0 0.0
    %860 = vmatpush.msra.mxu0 0.0
    %861 = vmatpush.msra.mxu0 0.0
    %862 = vmatpush.msra.mxu0 0.0
    %863 = vmatpush.msra.mxu0 %v840
    %864 = vmatpush.msra.mxu0 %v839
    %865 = vmatpush.msra.mxu0 %v838
    %866 = vmatpush.msra.mxu0 %v837
    %867 = vmatmul.f32.gmra.mxu0 %v846
    %v868 = vpop.f32.mrf.mxu0
    %v869 = vadd.f32 %v843, %v868
    %870 = vmatmul.f32.gmra.mxu0 %v849
    %v871 = vpop.f32.mrf.mxu0
    %v872 = vadd.f32 %v843, %v871
    %873 = vdwg.mxu0
    %v874 = vadd.f32 %v869, %v54
    %v875 = vadd.f32 %v872, %v55
    %v876 = vsel %vm56, %v874, 0.0
    %877 = vadd.xlane.f32.xlu0 %v876
    %v878 = vpop.xlane.xlu0 %877
    %v879 = vsel %vm56, %v875, 0.0
    %880 = vadd.xlane.f32.xlu0 %v879
    %v881 = vpop.xlane.xlu0 %880
    %v882 = vmul.f32 %v878, %v69
    %v883 = vmul.f32 %v881, %v69
    %v884 = vsub.f32 %v874, %v882
    %v885 = vsub.f32 %v875, %v883
    %v886 = vmul.f32 %v884, %v884
    %v887 = vmul.f32 %v885, %v885
    %v888 = vsel %vm56, %v886, 0.0
    %889 = vadd.xlane.f32.xlu0 %v888
    %v890 = vpop.xlane.xlu0 %889
    %v891 = vsel %vm56, %v887, 0.0
    %892 = vadd.xlane.f32.xlu0 %v891
    %v893 = vpop.xlane.xlu0 %892
    %v894 = vmul.f32 %v890, %v69
    %v895 = vmul.f32 %v893, %v69
    %v896 = vadd.f32 %v894, 1e-05
    %v897 = vadd.f32 %v895, 1e-05
    %v898 = vrsqrt.pop %v896
    %v899 = vmul.f32 %v898, %v896
    %v900 = vmul.f32 %v899, %v898
    %v901 = vmul.f32 0.5, %v900
    %v902 = vsub.f32 1.5, %v901
    %v903 = vmul.f32 %v898, %v902
    %vm904 = vweird.f32 %v896
    %vm905 = vweird.f32 %v898
    %vm906 = vmor %vm904, %vm905
    %v907 = vsel %vm906, %v898, %v903
    %v908 = vrsqrt.pop %v897
    %v909 = vmul.f32 %v908, %v897
    %v910 = vmul.f32 %v909, %v908
    %v911 = vmul.f32 0.5, %v910
    %v912 = vsub.f32 1.5, %v911
    %v913 = vmul.f32 %v908, %v912
    %vm914 = vweird.f32 %v897
    %vm915 = vweird.f32 %v908
    %vm916 = vmor %vm914, %vm915
    %v917 = vsel %vm916, %v908, %v913
    %v918 = vmul.f32 %v884, %v907
    %v919 = vmul.f32 %v885, %v917
    %v920 = vld [vmem:[%s11] sm:$0x1]
    %v921 = vperm.slane %v920, 0
    %v922 = vmul.f32 %v918, %v921
    %v923 = vmul.f32 %v919, %v921
    %v924 = vld [vmem:[%s11 + $0x1] sm:$0x1]
    %v925 = vperm.slane %v924, 0
    %v926 = vadd.f32 %v922, %v925
    %v927 = vadd.f32 %v923, %v925
    %v928 = vld [vmem:[%s12] sm:$0xff]
    %v929 = vld [vmem:[%s12 + $0x8] sm:$0xff]
    %v930 = vld [vmem:[%s12 + $0x10] sm:$0xff]
    %v931 = vld [vmem:[%s12 + $0x18] sm:$0xff]
    %v932 = vld [vmem:[%s13] sm:$0x1]
    %v934 = vperm.slane %v932, 0
    %v937 = vsel %vm56, %v926, 0
    %v940 = vsel %vm56, %v927, 0
    %942 = vmatpush.msra.mxu0 0.0
    %943 = vmatpush.msra.mxu0 0.0
    %944 = vmatpush.msra.mxu0 0.0
    %945 = vmatpush.msra.mxu0 0.0
    %946 = vmatpush.msra.mxu0 0.0
    %947 = vmatpush.msra.mxu0 0.0
    %948 = vmatpush.msra.mxu0 0.0
    %949 = vmatpush.msra.mxu0 0.0
    %950 = vmatpush.msra.mxu0 0.0
    %951 = vmatpush.msra.mxu0 0.0
    %952 = vmatpush.msra.mxu0 0.0
    %953 = vmatpush.msra.mxu0 0.0
    %954 = vmatpush.msra.mxu0 %v931
    %955 = vmatpush.msra.mxu0 %v930
    %956 = vmatpush.msra.mxu0 %v929
    %957 = vmatpush.msra.mxu0 %v928
    %958 = vmatmul.f32.gmra.mxu0 %v937
    %v959 = vpop.f32.mrf.mxu0
    %v960 = vadd.f32 %v934, %v959
    %961 = vmatmul.f32.gmra.mxu0 %v940
    %v962 = vpop.f32.mrf.mxu0
    %v963 = vadd.f32 %v934, %v962
    %964 = vdwg.mxu0
    %v965 = vmul.f32 %v960, 0.5
    %v966 = vmul.f32 %v963, 0.5
    %v967 = vrcp.pop 1.4142135
    %v968 = vmul.f32 1.4142135, %v967
    %v969 = vsub.f32 1.0, %v968
    %v970 = vmul.f32 %v967, %v969
    %v971 = vadd.f32 %v967, %v970
    %vm972 = vweird.f32 %v967
    %v973 = vsel %vm972, %v967, %v971
    %v974 = vmul.f32 %v960, %v973
    %v975 = vmul.f32 %v963, %v973
    %v976 = vmul.f32 %v974, %v974
    %v977 = vmin.f32 16.0, %v976
    %v978 = vmul.f32 %v977, 2.1237322e-06
    %v979 = vadd.f32 %v978, 0.00028619796
    %v980 = vmul.f32 %v977, %v979
    %v981 = vadd.f32 %v980, 0.0036580483
    %v982 = vmul.f32 %v977, %v981
    %v983 = vadd.f32 %v982, 0.05243302
    %v984 = vmul.f32 %v977, %v983
    %v985 = vadd.f32 %v984, 0.18741608
    %v986 = vmul.f32 %v977, %v985
    %v987 = vadd.f32 %v986, 1.1283791
    %v988 = vmul.f32 %v974, %v987
    %v989 = vmul.f32 %v977, 3.8918573e-05
    %v990 = vadd.f32 %v989, 0.001143296
    %v991 = vmul.f32 %v977, %v990
    %v992 = vadd.f32 %v991, 0.014752088
    %v993 = vmul.f32 %v977, %v992
    %v994 = vadd.f32 %v993, 0.112945676
    %v995 = vmul.f32 %v977, %v994
    %v996 = vadd.f32 %v995, 0.4994258
    %v997 = vmul.f32 %v977, %v996
    %v998 = vadd.f32 %v997, 1.0
    %v999 = vrcp.pop %v998
    %v1000 = vmul.f32 %v998, %v999
    %v1001 = vsub.f32 1.0, %v1000
    %v1002 = vmul.f32 %v999, %v1001
    %v1003 = vadd.f32 %v999, %v1002
    %vm1004 = vweird.f32 %v998
    %vm1005 = vweird.f32 %v999
    %vm1006 = vmor %vm1004, %vm1005
    %v1007 = vsel %vm1006, %v999, %v1003
    %v1008 = vand.u32 2147483647, %v998
    %vm1009 = vcmp.eq.f32.partialorder %v1008, 8.507059e+37
    %v1010 = vand.u32 %v998, 2147483648
    %v1011 = vor.u32 1.1754944e-38, %v1010
    %v1012 = vsel %vm1009, %v1011, %v1007
    %v1013 = vmul.f32 %v988, %v1012
    %v1014 = vmin.f32 %v1013, 1.0
    %v1015 = vmax.f32 %v1014, -1.0
    %v1016 = vmul.f32 %v975, %v975
    %v1017 = vmin.f32 16.0, %v1016
    %v1018 = vmul.f32 %v1017, 2.1237322e-06
    %v1019 = vadd.f32 %v1018, 0.00028619796
    %v1020 = vmul.f32 %v1017, %v1019
    %v1021 = vadd.f32 %v1020, 0.0036580483
    %v1022 = vmul.f32 %v1017, %v1021
    %v1023 = vadd.f32 %v1022, 0.05243302
    %v1024 = vmul.f32 %v1017, %v1023
    %v1025 = vadd.f32 %v1024, 0.18741608
    %v1026 = vmul.f32 %v1017, %v1025
    %v1027 = vadd.f32 %v1026, 1.1283791
    %v1028 = vmul.f32 %v975, %v1027
    %v1029 = vmul.f32 %v1017, 3.8918573e-05
    %v1030 = vadd.f32 %v1029, 0.001143296
    %v1031 = vmul.f32 %v1017, %v1030
    %v1032 = vadd.f32 %v1031, 0.014752088
    %v1033 = vmul.f32 %v1017, %v1032
    %v1034 = vadd.f32 %v1033, 0.112945676
    %v1035 = vmul.f32 %v1017, %v1034
    %v1036 = vadd.f32 %v1035, 0.4994258
    %v1037 = vmul.f32 %v1017, %v1036
    %v1038 = vadd.f32 %v1037, 1.0
    %v1039 = vrcp.pop %v1038
    %v1040 = vmul.f32 %v1038, %v1039
    %v1041 = vsub.f32 1.0, %v1040
    %v1042 = vmul.f32 %v1039, %v1041
    %v1043 = vadd.f32 %v1039, %v1042
    %vm1044 = vweird.f32 %v1038
    %vm1045 = vweird.f32 %v1039
    %vm1046 = vmor %vm1044, %vm1045
    %v1047 = vsel %vm1046, %v1039, %v1043
    %v1048 = vand.u32 2147483647, %v1038
    %vm1049 = vcmp.eq.f32.partialorder %v1048, 8.507059e+37
    %v1050 = vand.u32 %v1038, 2147483648
    %v1051 = vor.u32 1.1754944e-38, %v1050
    %v1052 = vsel %vm1049, %v1051, %v1047
    %v1053 = vmul.f32 %v1028, %v1052
    %v1054 = vmin.f32 %v1053, 1.0
    %v1055 = vmax.f32 %v1054, -1.0
    %v1056 = vadd.f32 %v1015, 1.0
    %v1057 = vadd.f32 %v1055, 1.0
    %v1058 = vmul.f32 %v965, %v1056
    %v1059 = vmul.f32 %v966, %v1057
    %v1060 = vld [vmem:[%s14] sm:$0xff]
    %v1061 = vld [vmem:[%s14 + $0x8] sm:$0xff]
    %v1062 = vld [vmem:[%s14 + $0x10] sm:$0xff]
    %v1063 = vld [vmem:[%s14 + $0x18] sm:$0xff]
    %v1064 = vld [vmem:[%s14 + $0x20] sm:$0xff]
    %v1065 = vld [vmem:[%s14 + $0x28] sm:$0xff]
    %v1066 = vld [vmem:[%s14 + $0x30] sm:$0xff]
    %v1067 = vld [vmem:[%s14 + $0x38] sm:$0xff]
    %v1068 = vld [vmem:[%s15] sm:$0x1]
    %v1070 = vperm.slane %v1068, 0
    %vm1072 = vcmask 523264
    %v1074 = vsel %vm1072, %v1058, 0
    %v1077 = vsel %vm1072, %v1059, 0
    %1079 = vmatpush.msra.mxu0 0.0
    %1080 = vmatpush.msra.mxu0 0.0
    %1081 = vmatpush.msra.mxu0 0.0
    %1082 = vmatpush.msra.mxu0 0.0
    %1083 = vmatpush.msra.mxu0 0.0
    %1084 = vmatpush.msra.mxu0 0.0
    %1085 = vmatpush.msra.mxu0 0.0
    %1086 = vmatpush.msra.mxu0 0.0
    %1087 = vmatpush.msra.mxu0 %v1067
    %1088 = vmatpush.msra.mxu0 %v1066
    %1089 = vmatpush.msra.mxu0 %v1065
    %1090 = vmatpush.msra.mxu0 %v1064
    %1091 = vmatpush.msra.mxu0 %v1063
    %1092 = vmatpush.msra.mxu0 %v1062
    %1093 = vmatpush.msra.mxu0 %v1061
    %1094 = vmatpush.msra.mxu0 %v1060
    %1095 = vmatmul.f32.gmra.mxu0 %v1074
    %v1096 = vpop.f32.mrf.mxu0
    %v1097 = vadd.f32 %v1070, %v1096
    %1098 = vmatmul.f32.gmra.mxu0 %v1077
    %v1099 = vpop.f32.mrf.mxu0
    %v1100 = vadd.f32 %v1070, %v1099
    %1101 = vdwg.mxu0
    %v1102 = vadd.f32 %v1097, %v874
    %v1103 = vadd.f32 %v1100, %v875
    %1104 = vst.msk [vmem:[#allocation2] sm:$0xff] %vm56, %v1102
    %1105 = vst.msk [vmem:[#allocation2 + $0x8] sm:$0xff] %vm56, %v1103
    // Predicated region
    $region66: #{tpu_custom_call.1} parent=1 // pred_check
      _
    $region67: #{tpu_custom_call.1} parent=1 // pred_check_branch
      %1107 = sbr.rel (0) target = $region69
    $region68: #{tpu_custom_call.1} parent=1 // pred_region
      %1109 = vsyncadd [#allocation3], 0
      %s1110 = sshll.u32 [#allocation2], 4
      %s1111 = int_to_ptr.vmem [resolvable:$true] %s1110
      %s1112 = sshll.u32 %s16, 4
      %s1113 = int_to_ptr.hbm [resolvable:$true] %s1112
      %1118 = dma.vmem_to_hbm [thread:$0]  %s1111, 256, %s1113, [#allocation3], 128, 128, 8
    $region69: #{tpu_custom_call.1} parent=1 // pred_fallthru
      _
    // Predicated region
    $region70: #{tpu_custom_call.1} parent=1 // pred_check
      _
    $region71: #{tpu_custom_call.1} parent=1 // pred_check_branch
      %1120 = sbr.rel (0) target = $region73
    $region72: #{tpu_custom_call.1} parent=1 // pred_region
      %1122 = dma.done [#allocation3], 256
    $region73: #{tpu_custom_call.1} parent=1 // pred_fallthru
      _
    %1123 = vsyncpa [#allocation3], 1

</llo_original>
